<compile_context>
chip_gen: v7x
topology: tpu7x:2x2x1
jax: 0.10.0
libtpu: 0.0.40
codegen_flags: <defaults>
</compile_context>

<pallas_src>
import functools

import jax
import jax.numpy as jnp
from jax.experimental import pallas as pl
from jax.experimental.pallas import tpu as pltpu


# ----------------------------------------------------------------------------
# Fused GRU step (PyTorch semantics, gate order: reset, update, new)
# ----------------------------------------------------------------------------
def _fused_gru_step(gx, h, w_hh, b_hn, H):
    """gx: (B, 3H) = x @ W_ih_fused + folded biases (b_ih all gates, b_hh r/z).
    b_hn stays separate: n = tanh(x@W_in + b_in + r*(h@W_hn + b_hn))."""
    gh = jnp.dot(h, w_hh, preferred_element_type=jnp.float32)          # (B, 3H)
    r = jax.nn.sigmoid(gx[:, 0:H] + gh[:, 0:H])
    z = jax.nn.sigmoid(gx[:, H:2 * H] + gh[:, H:2 * H])
    n = jnp.tanh(gx[:, 2 * H:3 * H] + r * (gh[:, 2 * H:3 * H] + b_hn))
    return (1.0 - z) * n + z * h


# ----------------------------------------------------------------------------
# Pallas kernel: encoder recurrence + autoregressive decoder + readout
# ----------------------------------------------------------------------------
def _enc_dec_kernel(x_flat_ref, dec_flat_ref, y0_ref,
                    we_ih_ref, we_hh_ref, be_x_ref, be_hn_ref,
                    wd_y_ref, wd_x_ref, wd_hh_ref, bd_x_ref, bd_hn_ref,
                    w_out_ref, b_out_ref,
                    out_ref, *, hidden, out_steps, seq_len, batch):
    H, B = hidden, batch

    # ---- encoder ----
    we_hh = we_hh_ref[...]                                   # (H, 3H)
    be_hn = be_hn_ref[...]                                   # (1, H)

    # Hoisted input projection: one (T*B, F_in) @ (F_in, 3H) matmul, biases
    # folded.  Nothing here sits on the recurrent dependency chain.
    x_proj = (jnp.dot(x_flat_ref[...], we_ih_ref[...],
                      preferred_element_type=jnp.float32)
              + be_x_ref[...])                               # (T*B, 3H)

    h = jnp.zeros((B, H), dtype=jnp.float32)
    for t in range(seq_len):                                 # static unroll
        gx = x_proj[t * B:(t + 1) * B, :]
        h = _fused_gru_step(gx, h, we_hh, be_hn, H)          # encoder_hidden

    # ---- decoder: autoregressive GRU cell + linear readout ----
    wd_y = wd_y_ref[...]                                     # (1, 3H)
    wd_hh = wd_hh_ref[...]                                   # (H, 3H)
    bd_hn = bd_hn_ref[...]                                   # (1, H)
    w_out = w_out_ref[...]                                   # (H, 1)
    b_out = b_out_ref[...]                                   # (1, 1)

    # Hoisted decoder-exogenous projection: one (OUT*B, F_dec) @ (F_dec, 3H).
    d_proj = (jnp.dot(dec_flat_ref[...], wd_x_ref[...],
                      preferred_element_type=jnp.float32)
              + bd_x_ref[...])                               # (OUT*B, 3H)

    y_prev = y0_ref[...]                                     # (B, 1) = x[:, -1, 0:1]

    # TODO(synk): the torch.rand(1) teacher-forcing branch (training-only,
    # yb is not None) is stochastic control flow; only the inference path
    # (yb=None) is implemented here.
    for i in range(out_steps):                               # static unroll
        # rank-1 y_prev term as a VPU broadcast-mul (no concat, no width-1
        # MXU matmul on the serial chain).
        gx = d_proj[i * B:(i + 1) * B, :] + y_prev * wd_y
        h = _fused_gru_step(gx, h, wd_hh, bd_hn, H)
        y = jnp.dot(h, w_out, preferred_element_type=jnp.float32) + b_out
        out_ref[:, i:i + 1] = y                              # direct per-step store
        y_prev = y


# ----------------------------------------------------------------------------
# Parameter packing (gate fusion + bias folding) — plain JAX, one-time
# ----------------------------------------------------------------------------
def _fuse_gates(w3):
    # (3, F, H) -> (F, 3H), gate order (r, z, n) preserved along lanes.
    return jnp.concatenate([w3[0], w3[1], w3[2]], axis=-1)


def pack_params(params):
    be_ih, be_hh = params["be_ih"], params["be_hh"]          # (3, 1, H)
    bd_ih, bd_hh = params["bd_ih"], params["bd_hh"]
    wd_ih = _fuse_gates(params["wd_ih"])                     # (1 + F_dec, 3H)
    return {
        "we_ih": _fuse_gates(params["we_ih"]),               # (F_in, 3H)
        "we_hh": _fuse_gates(params["we_hh"]),               # (H, 3H)
        "be_x": jnp.concatenate(
            [be_ih[0] + be_hh[0], be_ih[1] + be_hh[1], be_ih[2]], axis=-1),
        "be_hn": be_hh[2],                                   # (1, H)
        "wd_y": wd_ih[0:1, :],                               # (1, 3H)  (y_prev row)
        "wd_x": wd_ih[1:, :],                                # (F_dec, 3H)
        "wd_hh": _fuse_gates(params["wd_hh"]),               # (H, 3H)
        "bd_x": jnp.concatenate(
            [bd_ih[0] + bd_hh[0], bd_ih[1] + bd_hh[1], bd_ih[2]], axis=-1),
        "bd_hn": bd_hh[2],                                   # (1, H)
        "w_out": params["w_out"],                            # (H, 1)
        "b_out": params["b_out"],                            # (1, 1)
    }


def encoder_decoder_forward(x_seq_bm, dec_in_bm, params):
    """x_seq_bm: (B, T, F_in) batch-major; dec_in_bm: (B, OUT, F_dec)."""
    B, T, F_in = x_seq_bm.shape
    OUT, F_dec = dec_in_bm.shape[1], dec_in_bm.shape[2]
    H = params["we_hh"].shape[-1]

    # Layout plumbing (plain JAX): time/step-major, flattened so the hoisted
    # input projections are single matmuls and per-step row slices are
    # sublane-aligned (B multiple of 8 here).
    x_flat = jnp.transpose(x_seq_bm, (1, 0, 2)).reshape(T * B, F_in)
    dec_flat = jnp.transpose(dec_in_bm, (1, 0, 2)).reshape(OUT * B, F_dec)
    y0 = x_seq_bm[:, -1, 0:1]                                # (B, 1)

    p = pack_params(params)
    kernel = functools.partial(_enc_dec_kernel, hidden=H, out_steps=OUT,
                               seq_len=T, batch=B)
    args = (x_flat, dec_flat, y0,
            p["we_ih"], p["we_hh"], p["be_x"], p["be_hn"],
            p["wd_y"], p["wd_x"], p["wd_hh"], p["bd_x"], p["bd_hn"],
            p["w_out"], p["b_out"])

    vmem = pl.BlockSpec(memory_space=pltpu.MemorySpace.VMEM)
    # TODO(synk): for production batch sizes (B >> 8) add a grid over the
    # batch dim with dimension_semantics=("parallel",) so v7x's second
    # TensorCore is used; at B=8 the whole problem is a few KiB and a single
    # gridless invocation is optimal.
    return pl.pallas_call(
        kernel,
        out_shape=jax.ShapeDtypeStruct((B, OUT), jnp.float32),
        in_specs=[vmem] * len(args),
        out_specs=vmem,
    )(*args)


# ----------------------------------------------------------------------------
# Pure-JAX reference (mirrors the PyTorch forward, unfused) for checking
# ----------------------------------------------------------------------------
def _ref_gru_step(x, h, w_i, w_h, b_i, b_h):
    r = jax.nn.sigmoid(jnp.dot(x, w_i[0]) + b_i[0] + jnp.dot(h, w_h[0]) + b_h[0])
    z = jax.nn.sigmoid(jnp.dot(x, w_i[1]) + b_i[1] + jnp.dot(h, w_h[1]) + b_h[1])
    n = jnp.tanh(jnp.dot(x, w_i[2]) + b_i[2] + r * (jnp.dot(h, w_h[2]) + b_h[2]))
    return (1.0 - z) * n + z * h


def reference_forward(x_seq_bm, dec_in_bm, params):
    B, T, _ = x_seq_bm.shape
    OUT = dec_in_bm.shape[1]
    H = params["we_hh"].shape[-1]

    h = jnp.zeros((B, H), jnp.float32)
    for t in range(T):
        h = _ref_gru_step(x_seq_bm[:, t], h, params["we_ih"], params["we_hh"],
                          params["be_ih"], params["be_hh"])

    y_prev = x_seq_bm[:, -1, 0:1]
    outs = []
    for i in range(OUT):
        step_in = jnp.concatenate([y_prev, dec_in_bm[:, i]], axis=1)
        h = _ref_gru_step(step_in, h, params["wd_ih"], params["wd_hh"],
                          params["bd_ih"], params["bd_hh"])
        y = jnp.dot(h, params["w_out"]) + params["b_out"]
        y_prev = y
        outs.append(y)
    return jnp.concatenate(outs, axis=1)


# ----------------------------------------------------------------------------
if __name__ == "__main__":
    # Small shapes consistent with the module's forward:
    #   xb = [input_seq (B, T, F_in), decoder_input (B, OUT, F_dec)]
    B, T, F_in, F_dec, H, OUT = 8, 8, 4, 4, 32, 3
    key = jax.random.PRNGKey(0)
    ks = jax.random.split(key, 12)
    s = 0.1  # deterministic small init scale

    x_seq = jax.random.normal(ks[0], (B, T, F_in), jnp.float32)
    dec_in = jax.random.normal(ks[1], (B, OUT, F_dec), jnp.float32)

    params = {
        # encoder GRU (input F_in -> hidden H), gates packed on leading axis
        "we_ih": s * jax.random.normal(ks[2], (3, F_in, H), jnp.float32),
        "we_hh": s * jax.random.normal(ks[3], (3, H, H), jnp.float32),
        "be_ih": s * jax.random.normal(ks[4], (3, 1, H), jnp.float32),
        "be_hh": s * jax.random.normal(ks[5], (3, 1, H), jnp.float32),
        # decoder GRU cell (input 1 + F_dec -> hidden H)
        "wd_ih": s * jax.random.normal(ks[6], (3, 1 + F_dec, H), jnp.float32),
        "wd_hh": s * jax.random.normal(ks[7], (3, H, H), jnp.float32),
        "bd_ih": s * jax.random.normal(ks[8], (3, 1, H), jnp.float32),
        "bd_hh": s * jax.random.normal(ks[9], (3, 1, H), jnp.float32),
        # linear readout hidden -> 1 (rnn_output)
        "w_out": s * jax.random.normal(ks[10], (H, 1), jnp.float32),
        "b_out": s * jax.random.normal(ks[11], (1, 1), jnp.float32),
    }

    out = encoder_decoder_forward(x_seq, dec_in, params)
    out = jax.block_until_ready(out)

    ref = reference_forward(x_seq, dec_in, params)
    assert out.shape == (B, OUT)
    assert jnp.allclose(out, ref, atol=1e-4, rtol=1e-4), (out, ref)
    print("KERNEL_OK")
</pallas_src>

<mosaic_0001>
module attributes {stable_mosaic.version = 11 : i64} {
  func.func @_enc_dec_kernel(%arg0: memref<64x4xf32, #tpu.memory_space<vmem>>, %arg1: memref<24x4xf32, #tpu.memory_space<vmem>>, %arg2: memref<8x1xf32, #tpu.memory_space<vmem>>, %arg3: memref<4x96xf32, #tpu.memory_space<vmem>>, %arg4: memref<32x96xf32, #tpu.memory_space<vmem>>, %arg5: memref<1x96xf32, #tpu.memory_space<vmem>>, %arg6: memref<1x32xf32, #tpu.memory_space<vmem>>, %arg7: memref<1x96xf32, #tpu.memory_space<vmem>>, %arg8: memref<4x96xf32, #tpu.memory_space<vmem>>, %arg9: memref<32x96xf32, #tpu.memory_space<vmem>>, %arg10: memref<1x96xf32, #tpu.memory_space<vmem>>, %arg11: memref<1x32xf32, #tpu.memory_space<vmem>>, %arg12: memref<32x1xf32, #tpu.memory_space<vmem>>, %arg13: memref<1x1xf32, #tpu.memory_space<vmem>>, %arg14: memref<8x3xf32, #tpu.memory_space<vmem>>) attributes {dimension_semantics = [], scalar_prefetch = 0 : i64, scratch_operands = 0 : i64, tpu.core_type = #tpu.core_type<tc>} {
    %c0 = arith.constant 0 : index
    %c0_0 = arith.constant 0 : index
    %0 = vector.load %arg4[%c0, %c0_0] : memref<32x96xf32, #tpu.memory_space<vmem>>, vector<32x96xf32>
    %c0_1 = arith.constant 0 : index
    %c0_2 = arith.constant 0 : index
    %1 = vector.load %arg6[%c0_1, %c0_2] : memref<1x32xf32, #tpu.memory_space<vmem>>, vector<1x32xf32>
    %c0_3 = arith.constant 0 : index
    %c0_4 = arith.constant 0 : index
    %2 = vector.load %arg0[%c0_3, %c0_4] : memref<64x4xf32, #tpu.memory_space<vmem>>, vector<64x4xf32>
    %c0_5 = arith.constant 0 : index
    %c0_6 = arith.constant 0 : index
    %3 = vector.load %arg3[%c0_5, %c0_6] : memref<4x96xf32, #tpu.memory_space<vmem>>, vector<4x96xf32>
    %cst = arith.constant dense<0.000000e+00> : vector<64x96xf32>
    %4 = tpu.matmul %2, %3, %cst {dimension_numbers = #tpu.dot_dimension_numbers<[1], [0], [0], [1], [0, 0, 1, 1], [], []>} : vector<64x4xf32>, vector<4x96xf32>, vector<64x96xf32> -> vector<64x96xf32>
    %c0_7 = arith.constant 0 : index
    %c0_8 = arith.constant 0 : index
    %5 = vector.load %arg5[%c0_7, %c0_8] : memref<1x96xf32, #tpu.memory_space<vmem>>, vector<1x96xf32>
    %6 = vector.broadcast %5 : vector<1x96xf32> to vector<64x96xf32>
    %7 = arith.addf %4, %6 : vector<64x96xf32>
    %cst_9 = arith.constant 0.000000e+00 : f32
    %8 = vector.broadcast %cst_9 : f32 to vector<8x32xf32>
    %9 = vector.extract_strided_slice %7 {offsets = [0, 0], sizes = [8, 96], strides = [1, 1]} : vector<64x96xf32> to vector<8x96xf32>
    %cst_10 = arith.constant dense<0.000000e+00> : vector<8x96xf32>
    %10 = tpu.matmul %8, %0, %cst_10 {dimension_numbers = #tpu.dot_dimension_numbers<[1], [0], [0], [1], [0, 0, 1, 1], [], []>} : vector<8x32xf32>, vector<32x96xf32>, vector<8x96xf32> -> vector<8x96xf32>
    %11 = vector.extract_strided_slice %9 {offsets = [0, 0], sizes = [8, 32], strides = [1, 1]} : vector<8x96xf32> to vector<8x32xf32>
    %12 = vector.extract_strided_slice %10 {offsets = [0, 0], sizes = [8, 32], strides = [1, 1]} : vector<8x96xf32> to vector<8x32xf32>
    %13 = arith.addf %11, %12 : vector<8x32xf32>
    %14 = arith.negf %13 : vector<8x32xf32>
    %15 = math.exp %14 : vector<8x32xf32>
    %cst_11 = arith.constant 1.000000e+00 : f32
    %16 = vector.broadcast %cst_11 : f32 to vector<8x32xf32>
    %17 = arith.addf %16, %15 : vector<8x32xf32>
    %18 = arith.divf %16, %17 : vector<8x32xf32>
    %19 = vector.extract_strided_slice %9 {offsets = [0, 32], sizes = [8, 32], strides = [1, 1]} : vector<8x96xf32> to vector<8x32xf32>
    %20 = vector.extract_strided_slice %10 {offsets = [0, 32], sizes = [8, 32], strides = [1, 1]} : vector<8x96xf32> to vector<8x32xf32>
    %21 = arith.addf %19, %20 : vector<8x32xf32>
    %22 = arith.negf %21 : vector<8x32xf32>
    %23 = math.exp %22 : vector<8x32xf32>
    %cst_12 = arith.constant 1.000000e+00 : f32
    %24 = vector.broadcast %cst_12 : f32 to vector<8x32xf32>
    %25 = arith.addf %24, %23 : vector<8x32xf32>
    %26 = arith.divf %24, %25 : vector<8x32xf32>
    %27 = vector.extract_strided_slice %9 {offsets = [0, 64], sizes = [8, 32], strides = [1, 1]} : vector<8x96xf32> to vector<8x32xf32>
    %28 = vector.extract_strided_slice %10 {offsets = [0, 64], sizes = [8, 32], strides = [1, 1]} : vector<8x96xf32> to vector<8x32xf32>
    %29 = vector.broadcast %1 : vector<1x32xf32> to vector<8x32xf32>
    %30 = arith.addf %28, %29 : vector<8x32xf32>
    %31 = arith.mulf %18, %30 : vector<8x32xf32>
    %32 = arith.addf %27, %31 : vector<8x32xf32>
    %33 = math.tanh %32 : vector<8x32xf32>
    %cst_13 = arith.constant 1.000000e+00 : f32
    %34 = vector.broadcast %cst_13 : f32 to vector<8x32xf32>
    %35 = arith.subf %34, %26 : vector<8x32xf32>
    %36 = arith.mulf %35, %33 : vector<8x32xf32>
    %37 = arith.mulf %26, %8 : vector<8x32xf32>
    %38 = arith.addf %36, %37 : vector<8x32xf32>
    %39 = vector.extract_strided_slice %7 {offsets = [8, 0], sizes = [8, 96], strides = [1, 1]} : vector<64x96xf32> to vector<8x96xf32>
    %cst_14 = arith.constant dense<0.000000e+00> : vector<8x96xf32>
    %40 = tpu.matmul %38, %0, %cst_14 {dimension_numbers = #tpu.dot_dimension_numbers<[1], [0], [0], [1], [0, 0, 1, 1], [], []>} : vector<8x32xf32>, vector<32x96xf32>, vector<8x96xf32> -> vector<8x96xf32>
    %41 = vector.extract_strided_slice %39 {offsets = [0, 0], sizes = [8, 32], strides = [1, 1]} : vector<8x96xf32> to vector<8x32xf32>
    %42 = vector.extract_strided_slice %40 {offsets = [0, 0], sizes = [8, 32], strides = [1, 1]} : vector<8x96xf32> to vector<8x32xf32>
    %43 = arith.addf %41, %42 : vector<8x32xf32>
    %44 = arith.negf %43 : vector<8x32xf32>
    %45 = math.exp %44 : vector<8x32xf32>
    %cst_15 = arith.constant 1.000000e+00 : f32
    %46 = vector.broadcast %cst_15 : f32 to vector<8x32xf32>
    %47 = arith.addf %46, %45 : vector<8x32xf32>
    %48 = arith.divf %46, %47 : vector<8x32xf32>
    %49 = vector.extract_strided_slice %39 {offsets = [0, 32], sizes = [8, 32], strides = [1, 1]} : vector<8x96xf32> to vector<8x32xf32>
    %50 = vector.extract_strided_slice %40 {offsets = [0, 32], sizes = [8, 32], strides = [1, 1]} : vector<8x96xf32> to vector<8x32xf32>
    %51 = arith.addf %49, %50 : vector<8x32xf32>
    %52 = arith.negf %51 : vector<8x32xf32>
    %53 = math.exp %52 : vector<8x32xf32>
    %cst_16 = arith.constant 1.000000e+00 : f32
    %54 = vector.broadcast %cst_16 : f32 to vector<8x32xf32>
    %55 = arith.addf %54, %53 : vector<8x32xf32>
    %56 = arith.divf %54, %55 : vector<8x32xf32>
    %57 = vector.extract_strided_slice %39 {offsets = [0, 64], sizes = [8, 32], strides = [1, 1]} : vector<8x96xf32> to vector<8x32xf32>
    %58 = vector.extract_strided_slice %40 {offsets = [0, 64], sizes = [8, 32], strides = [1, 1]} : vector<8x96xf32> to vector<8x32xf32>
    %59 = vector.broadcast %1 : vector<1x32xf32> to vector<8x32xf32>
    %60 = arith.addf %58, %59 : vector<8x32xf32>
    %61 = arith.mulf %48, %60 : vector<8x32xf32>
    %62 = arith.addf %57, %61 : vector<8x32xf32>
    %63 = math.tanh %62 : vector<8x32xf32>
    %cst_17 = arith.constant 1.000000e+00 : f32
    %64 = vector.broadcast %cst_17 : f32 to vector<8x32xf32>
    %65 = arith.subf %64, %56 : vector<8x32xf32>
    %66 = arith.mulf %65, %63 : vector<8x32xf32>
    %67 = arith.mulf %56, %38 : vector<8x32xf32>
    %68 = arith.addf %66, %67 : vector<8x32xf32>
    %69 = vector.extract_strided_slice %7 {offsets = [16, 0], sizes = [8, 96], strides = [1, 1]} : vector<64x96xf32> to vector<8x96xf32>
    %cst_18 = arith.constant dense<0.000000e+00> : vector<8x96xf32>
    %70 = tpu.matmul %68, %0, %cst_18 {dimension_numbers = #tpu.dot_dimension_numbers<[1], [0], [0], [1], [0, 0, 1, 1], [], []>} : vector<8x32xf32>, vector<32x96xf32>, vector<8x96xf32> -> vector<8x96xf32>
    %71 = vector.extract_strided_slice %69 {offsets = [0, 0], sizes = [8, 32], strides = [1, 1]} : vector<8x96xf32> to vector<8x32xf32>
    %72 = vector.extract_strided_slice %70 {offsets = [0, 0], sizes = [8, 32], strides = [1, 1]} : vector<8x96xf32> to vector<8x32xf32>
    %73 = arith.addf %71, %72 : vector<8x32xf32>
    %74 = arith.negf %73 : vector<8x32xf32>
    %75 = math.exp %74 : vector<8x32xf32>
    %cst_19 = arith.constant 1.000000e+00 : f32
    %76 = vector.broadcast %cst_19 : f32 to vector<8x32xf32>
    %77 = arith.addf %76, %75 : vector<8x32xf32>
    %78 = arith.divf %76, %77 : vector<8x32xf32>
    %79 = vector.extract_strided_slice %69 {offsets = [0, 32], sizes = [8, 32], strides = [1, 1]} : vector<8x96xf32> to vector<8x32xf32>
    %80 = vector.extract_strided_slice %70 {offsets = [0, 32], sizes = [8, 32], strides = [1, 1]} : vector<8x96xf32> to vector<8x32xf32>
    %81 = arith.addf %79, %80 : vector<8x32xf32>
    %82 = arith.negf %81 : vector<8x32xf32>
    %83 = math.exp %82 : vector<8x32xf32>
    %cst_20 = arith.constant 1.000000e+00 : f32
    %84 = vector.broadcast %cst_20 : f32 to vector<8x32xf32>
    %85 = arith.addf %84, %83 : vector<8x32xf32>
    %86 = arith.divf %84, %85 : vector<8x32xf32>
    %87 = vector.extract_strided_slice %69 {offsets = [0, 64], sizes = [8, 32], strides = [1, 1]} : vector<8x96xf32> to vector<8x32xf32>
    %88 = vector.extract_strided_slice %70 {offsets = [0, 64], sizes = [8, 32], strides = [1, 1]} : vector<8x96xf32> to vector<8x32xf32>
    %89 = vector.broadcast %1 : vector<1x32xf32> to vector<8x32xf32>
    %90 = arith.addf %88, %89 : vector<8x32xf32>
    %91 = arith.mulf %78, %90 : vector<8x32xf32>
    %92 = arith.addf %87, %91 : vector<8x32xf32>
    %93 = math.tanh %92 : vector<8x32xf32>
    %cst_21 = arith.constant 1.000000e+00 : f32
    %94 = vector.broadcast %cst_21 : f32 to vector<8x32xf32>
    %95 = arith.subf %94, %86 : vector<8x32xf32>
    %96 = arith.mulf %95, %93 : vector<8x32xf32>
    %97 = arith.mulf %86, %68 : vector<8x32xf32>
    %98 = arith.addf %96, %97 : vector<8x32xf32>
    %99 = vector.extract_strided_slice %7 {offsets = [24, 0], sizes = [8, 96], strides = [1, 1]} : vector<64x96xf32> to vector<8x96xf32>
    %cst_22 = arith.constant dense<0.000000e+00> : vector<8x96xf32>
    %100 = tpu.matmul %98, %0, %cst_22 {dimension_numbers = #tpu.dot_dimension_numbers<[1], [0], [0], [1], [0, 0, 1, 1], [], []>} : vector<8x32xf32>, vector<32x96xf32>, vector<8x96xf32> -> vector<8x96xf32>
    %101 = vector.extract_strided_slice %99 {offsets = [0, 0], sizes = [8, 32], strides = [1, 1]} : vector<8x96xf32> to vector<8x32xf32>
    %102 = vector.extract_strided_slice %100 {offsets = [0, 0], sizes = [8, 32], strides = [1, 1]} : vector<8x96xf32> to vector<8x32xf32>
    %103 = arith.addf %101, %102 : vector<8x32xf32>
    %104 = arith.negf %103 : vector<8x32xf32>
    %105 = math.exp %104 : vector<8x32xf32>
    %cst_23 = arith.constant 1.000000e+00 : f32
    %106 = vector.broadcast %cst_23 : f32 to vector<8x32xf32>
    %107 = arith.addf %106, %105 : vector<8x32xf32>
    %108 = arith.divf %106, %107 : vector<8x32xf32>
    %109 = vector.extract_strided_slice %99 {offsets = [0, 32], sizes = [8, 32], strides = [1, 1]} : vector<8x96xf32> to vector<8x32xf32>
    %110 = vector.extract_strided_slice %100 {offsets = [0, 32], sizes = [8, 32], strides = [1, 1]} : vector<8x96xf32> to vector<8x32xf32>
    %111 = arith.addf %109, %110 : vector<8x32xf32>
    %112 = arith.negf %111 : vector<8x32xf32>
    %113 = math.exp %112 : vector<8x32xf32>
    %cst_24 = arith.constant 1.000000e+00 : f32
    %114 = vector.broadcast %cst_24 : f32 to vector<8x32xf32>
    %115 = arith.addf %114, %113 : vector<8x32xf32>
    %116 = arith.divf %114, %115 : vector<8x32xf32>
    %117 = vector.extract_strided_slice %99 {offsets = [0, 64], sizes = [8, 32], strides = [1, 1]} : vector<8x96xf32> to vector<8x32xf32>
    %118 = vector.extract_strided_slice %100 {offsets = [0, 64], sizes = [8, 32], strides = [1, 1]} : vector<8x96xf32> to vector<8x32xf32>
    %119 = vector.broadcast %1 : vector<1x32xf32> to vector<8x32xf32>
    %120 = arith.addf %118, %119 : vector<8x32xf32>
    %121 = arith.mulf %108, %120 : vector<8x32xf32>
    %122 = arith.addf %117, %121 : vector<8x32xf32>
    %123 = math.tanh %122 : vector<8x32xf32>
    %cst_25 = arith.constant 1.000000e+00 : f32
    %124 = vector.broadcast %cst_25 : f32 to vector<8x32xf32>
    %125 = arith.subf %124, %116 : vector<8x32xf32>
    %126 = arith.mulf %125, %123 : vector<8x32xf32>
    %127 = arith.mulf %116, %98 : vector<8x32xf32>
    %128 = arith.addf %126, %127 : vector<8x32xf32>
    %129 = vector.extract_strided_slice %7 {offsets = [32, 0], sizes = [8, 96], strides = [1, 1]} : vector<64x96xf32> to vector<8x96xf32>
    %cst_26 = arith.constant dense<0.000000e+00> : vector<8x96xf32>
    %130 = tpu.matmul %128, %0, %cst_26 {dimension_numbers = #tpu.dot_dimension_numbers<[1], [0], [0], [1], [0, 0, 1, 1], [], []>} : vector<8x32xf32>, vector<32x96xf32>, vector<8x96xf32> -> vector<8x96xf32>
    %131 = vector.extract_strided_slice %129 {offsets = [0, 0], sizes = [8, 32], strides = [1, 1]} : vector<8x96xf32> to vector<8x32xf32>
    %132 = vector.extract_strided_slice %130 {offsets = [0, 0], sizes = [8, 32], strides = [1, 1]} : vector<8x96xf32> to vector<8x32xf32>
    %133 = arith.addf %131, %132 : vector<8x32xf32>
    %134 = arith.negf %133 : vector<8x32xf32>
    %135 = math.exp %134 : vector<8x32xf32>
    %cst_27 = arith.constant 1.000000e+00 : f32
    %136 = vector.broadcast %cst_27 : f32 to vector<8x32xf32>
    %137 = arith.addf %136, %135 : vector<8x32xf32>
    %138 = arith.divf %136, %137 : vector<8x32xf32>
    %139 = vector.extract_strided_slice %129 {offsets = [0, 32], sizes = [8, 32], strides = [1, 1]} : vector<8x96xf32> to vector<8x32xf32>
    %140 = vector.extract_strided_slice %130 {offsets = [0, 32], sizes = [8, 32], strides = [1, 1]} : vector<8x96xf32> to vector<8x32xf32>
    %141 = arith.addf %139, %140 : vector<8x32xf32>
    %142 = arith.negf %141 : vector<8x32xf32>
    %143 = math.exp %142 : vector<8x32xf32>
    %cst_28 = arith.constant 1.000000e+00 : f32
    %144 = vector.broadcast %cst_28 : f32 to vector<8x32xf32>
    %145 = arith.addf %144, %143 : vector<8x32xf32>
    %146 = arith.divf %144, %145 : vector<8x32xf32>
    %147 = vector.extract_strided_slice %129 {offsets = [0, 64], sizes = [8, 32], strides = [1, 1]} : vector<8x96xf32> to vector<8x32xf32>
    %148 = vector.extract_strided_slice %130 {offsets = [0, 64], sizes = [8, 32], strides = [1, 1]} : vector<8x96xf32> to vector<8x32xf32>
    %149 = vector.broadcast %1 : vector<1x32xf32> to vector<8x32xf32>
    %150 = arith.addf %148, %149 : vector<8x32xf32>
    %151 = arith.mulf %138, %150 : vector<8x32xf32>
    %152 = arith.addf %147, %151 : vector<8x32xf32>
    %153 = math.tanh %152 : vector<8x32xf32>
    %cst_29 = arith.constant 1.000000e+00 : f32
    %154 = vector.broadcast %cst_29 : f32 to vector<8x32xf32>
    %155 = arith.subf %154, %146 : vector<8x32xf32>
    %156 = arith.mulf %155, %153 : vector<8x32xf32>
    %157 = arith.mulf %146, %128 : vector<8x32xf32>
    %158 = arith.addf %156, %157 : vector<8x32xf32>
    %159 = vector.extract_strided_slice %7 {offsets = [40, 0], sizes = [8, 96], strides = [1, 1]} : vector<64x96xf32> to vector<8x96xf32>
    %cst_30 = arith.constant dense<0.000000e+00> : vector<8x96xf32>
    %160 = tpu.matmul %158, %0, %cst_30 {dimension_numbers = #tpu.dot_dimension_numbers<[1], [0], [0], [1], [0, 0, 1, 1], [], []>} : vector<8x32xf32>, vector<32x96xf32>, vector<8x96xf32> -> vector<8x96xf32>
    %161 = vector.extract_strided_slice %159 {offsets = [0, 0], sizes = [8, 32], strides = [1, 1]} : vector<8x96xf32> to vector<8x32xf32>
    %162 = vector.extract_strided_slice %160 {offsets = [0, 0], sizes = [8, 32], strides = [1, 1]} : vector<8x96xf32> to vector<8x32xf32>
    %163 = arith.addf %161, %162 : vector<8x32xf32>
    %164 = arith.negf %163 : vector<8x32xf32>
    %165 = math.exp %164 : vector<8x32xf32>
    %cst_31 = arith.constant 1.000000e+00 : f32
    %166 = vector.broadcast %cst_31 : f32 to vector<8x32xf32>
    %167 = arith.addf %166, %165 : vector<8x32xf32>
    %168 = arith.divf %166, %167 : vector<8x32xf32>
    %169 = vector.extract_strided_slice %159 {offsets = [0, 32], sizes = [8, 32], strides = [1, 1]} : vector<8x96xf32> to vector<8x32xf32>
    %170 = vector.extract_strided_slice %160 {offsets = [0, 32], sizes = [8, 32], strides = [1, 1]} : vector<8x96xf32> to vector<8x32xf32>
    %171 = arith.addf %169, %170 : vector<8x32xf32>
    %172 = arith.negf %171 : vector<8x32xf32>
    %173 = math.exp %172 : vector<8x32xf32>
    %cst_32 = arith.constant 1.000000e+00 : f32
    %174 = vector.broadcast %cst_32 : f32 to vector<8x32xf32>
    %175 = arith.addf %174, %173 : vector<8x32xf32>
    %176 = arith.divf %174, %175 : vector<8x32xf32>
    %177 = vector.extract_strided_slice %159 {offsets = [0, 64], sizes = [8, 32], strides = [1, 1]} : vector<8x96xf32> to vector<8x32xf32>
    %178 = vector.extract_strided_slice %160 {offsets = [0, 64], sizes = [8, 32], strides = [1, 1]} : vector<8x96xf32> to vector<8x32xf32>
    %179 = vector.broadcast %1 : vector<1x32xf32> to vector<8x32xf32>
    %180 = arith.addf %178, %179 : vector<8x32xf32>
    %181 = arith.mulf %168, %180 : vector<8x32xf32>
    %182 = arith.addf %177, %181 : vector<8x32xf32>
    %183 = math.tanh %182 : vector<8x32xf32>
    %cst_33 = arith.constant 1.000000e+00 : f32
    %184 = vector.broadcast %cst_33 : f32 to vector<8x32xf32>
    %185 = arith.subf %184, %176 : vector<8x32xf32>
    %186 = arith.mulf %185, %183 : vector<8x32xf32>
    %187 = arith.mulf %176, %158 : vector<8x32xf32>
    %188 = arith.addf %186, %187 : vector<8x32xf32>
    %189 = vector.extract_strided_slice %7 {offsets = [48, 0], sizes = [8, 96], strides = [1, 1]} : vector<64x96xf32> to vector<8x96xf32>
    %cst_34 = arith.constant dense<0.000000e+00> : vector<8x96xf32>
    %190 = tpu.matmul %188, %0, %cst_34 {dimension_numbers = #tpu.dot_dimension_numbers<[1], [0], [0], [1], [0, 0, 1, 1], [], []>} : vector<8x32xf32>, vector<32x96xf32>, vector<8x96xf32> -> vector<8x96xf32>
    %191 = vector.extract_strided_slice %189 {offsets = [0, 0], sizes = [8, 32], strides = [1, 1]} : vector<8x96xf32> to vector<8x32xf32>
    %192 = vector.extract_strided_slice %190 {offsets = [0, 0], sizes = [8, 32], strides = [1, 1]} : vector<8x96xf32> to vector<8x32xf32>
    %193 = arith.addf %191, %192 : vector<8x32xf32>
    %194 = arith.negf %193 : vector<8x32xf32>
    %195 = math.exp %194 : vector<8x32xf32>
    %cst_35 = arith.constant 1.000000e+00 : f32
    %196 = vector.broadcast %cst_35 : f32 to vector<8x32xf32>
    %197 = arith.addf %196, %195 : vector<8x32xf32>
    %198 = arith.divf %196, %197 : vector<8x32xf32>
    %199 = vector.extract_strided_slice %189 {offsets = [0, 32], sizes = [8, 32], strides = [1, 1]} : vector<8x96xf32> to vector<8x32xf32>
    %200 = vector.extract_strided_slice %190 {offsets = [0, 32], sizes = [8, 32], strides = [1, 1]} : vector<8x96xf32> to vector<8x32xf32>
    %201 = arith.addf %199, %200 : vector<8x32xf32>
    %202 = arith.negf %201 : vector<8x32xf32>
    %203 = math.exp %202 : vector<8x32xf32>
    %cst_36 = arith.constant 1.000000e+00 : f32
    %204 = vector.broadcast %cst_36 : f32 to vector<8x32xf32>
    %205 = arith.addf %204, %203 : vector<8x32xf32>
    %206 = arith.divf %204, %205 : vector<8x32xf32>
    %207 = vector.extract_strided_slice %189 {offsets = [0, 64], sizes = [8, 32], strides = [1, 1]} : vector<8x96xf32> to vector<8x32xf32>
    %208 = vector.extract_strided_slice %190 {offsets = [0, 64], sizes = [8, 32], strides = [1, 1]} : vector<8x96xf32> to vector<8x32xf32>
    %209 = vector.broadcast %1 : vector<1x32xf32> to vector<8x32xf32>
    %210 = arith.addf %208, %209 : vector<8x32xf32>
    %211 = arith.mulf %198, %210 : vector<8x32xf32>
    %212 = arith.addf %207, %211 : vector<8x32xf32>
    %213 = math.tanh %212 : vector<8x32xf32>
    %cst_37 = arith.constant 1.000000e+00 : f32
    %214 = vector.broadcast %cst_37 : f32 to vector<8x32xf32>
    %215 = arith.subf %214, %206 : vector<8x32xf32>
    %216 = arith.mulf %215, %213 : vector<8x32xf32>
    %217 = arith.mulf %206, %188 : vector<8x32xf32>
    %218 = arith.addf %216, %217 : vector<8x32xf32>
    %219 = vector.extract_strided_slice %7 {offsets = [56, 0], sizes = [8, 96], strides = [1, 1]} : vector<64x96xf32> to vector<8x96xf32>
    %cst_38 = arith.constant dense<0.000000e+00> : vector<8x96xf32>
    %220 = tpu.matmul %218, %0, %cst_38 {dimension_numbers = #tpu.dot_dimension_numbers<[1], [0], [0], [1], [0, 0, 1, 1], [], []>} : vector<8x32xf32>, vector<32x96xf32>, vector<8x96xf32> -> vector<8x96xf32>
    %221 = vector.extract_strided_slice %219 {offsets = [0, 0], sizes = [8, 32], strides = [1, 1]} : vector<8x96xf32> to vector<8x32xf32>
    %222 = vector.extract_strided_slice %220 {offsets = [0, 0], sizes = [8, 32], strides = [1, 1]} : vector<8x96xf32> to vector<8x32xf32>
    %223 = arith.addf %221, %222 : vector<8x32xf32>
    %224 = arith.negf %223 : vector<8x32xf32>
    %225 = math.exp %224 : vector<8x32xf32>
    %cst_39 = arith.constant 1.000000e+00 : f32
    %226 = vector.broadcast %cst_39 : f32 to vector<8x32xf32>
    %227 = arith.addf %226, %225 : vector<8x32xf32>
    %228 = arith.divf %226, %227 : vector<8x32xf32>
    %229 = vector.extract_strided_slice %219 {offsets = [0, 32], sizes = [8, 32], strides = [1, 1]} : vector<8x96xf32> to vector<8x32xf32>
    %230 = vector.extract_strided_slice %220 {offsets = [0, 32], sizes = [8, 32], strides = [1, 1]} : vector<8x96xf32> to vector<8x32xf32>
    %231 = arith.addf %229, %230 : vector<8x32xf32>
    %232 = arith.negf %231 : vector<8x32xf32>
    %233 = math.exp %232 : vector<8x32xf32>
    %cst_40 = arith.constant 1.000000e+00 : f32
    %234 = vector.broadcast %cst_40 : f32 to vector<8x32xf32>
    %235 = arith.addf %234, %233 : vector<8x32xf32>
    %236 = arith.divf %234, %235 : vector<8x32xf32>
    %237 = vector.extract_strided_slice %219 {offsets = [0, 64], sizes = [8, 32], strides = [1, 1]} : vector<8x96xf32> to vector<8x32xf32>
    %238 = vector.extract_strided_slice %220 {offsets = [0, 64], sizes = [8, 32], strides = [1, 1]} : vector<8x96xf32> to vector<8x32xf32>
    %239 = vector.broadcast %1 : vector<1x32xf32> to vector<8x32xf32>
    %240 = arith.addf %238, %239 : vector<8x32xf32>
    %241 = arith.mulf %228, %240 : vector<8x32xf32>
    %242 = arith.addf %237, %241 : vector<8x32xf32>
    %243 = math.tanh %242 : vector<8x32xf32>
    %cst_41 = arith.constant 1.000000e+00 : f32
    %244 = vector.broadcast %cst_41 : f32 to vector<8x32xf32>
    %245 = arith.subf %244, %236 : vector<8x32xf32>
    %246 = arith.mulf %245, %243 : vector<8x32xf32>
    %247 = arith.mulf %236, %218 : vector<8x32xf32>
    %248 = arith.addf %246, %247 : vector<8x32xf32>
    %c0_42 = arith.constant 0 : index
    %c0_43 = arith.constant 0 : index
    %249 = vector.load %arg7[%c0_42, %c0_43] : memref<1x96xf32, #tpu.memory_space<vmem>>, vector<1x96xf32>
    %c0_44 = arith.constant 0 : index
    %c0_45 = arith.constant 0 : index
    %250 = vector.load %arg9[%c0_44, %c0_45] : memref<32x96xf32, #tpu.memory_space<vmem>>, vector<32x96xf32>
    %c0_46 = arith.constant 0 : index
    %c0_47 = arith.constant 0 : index
    %251 = vector.load %arg11[%c0_46, %c0_47] : memref<1x32xf32, #tpu.memory_space<vmem>>, vector<1x32xf32>
    %c0_48 = arith.constant 0 : index
    %c0_49 = arith.constant 0 : index
    %252 = vector.load %arg12[%c0_48, %c0_49] : memref<32x1xf32, #tpu.memory_space<vmem>>, vector<32x1xf32>
    %c0_50 = arith.constant 0 : index
    %c0_51 = arith.constant 0 : index
    %253 = vector.load %arg13[%c0_50, %c0_51] : memref<1x1xf32, #tpu.memory_space<vmem>>, vector<1x1xf32>
    %c0_52 = arith.constant 0 : index
    %c0_53 = arith.constant 0 : index
    %254 = vector.load %arg1[%c0_52, %c0_53] : memref<24x4xf32, #tpu.memory_space<vmem>>, vector<24x4xf32>
    %c0_54 = arith.constant 0 : index
    %c0_55 = arith.constant 0 : index
    %255 = vector.load %arg8[%c0_54, %c0_55] : memref<4x96xf32, #tpu.memory_space<vmem>>, vector<4x96xf32>
    %cst_56 = arith.constant dense<0.000000e+00> : vector<24x96xf32>
    %256 = tpu.matmul %254, %255, %cst_56 {dimension_numbers = #tpu.dot_dimension_numbers<[1], [0], [0], [1], [0, 0, 1, 1], [], []>} : vector<24x4xf32>, vector<4x96xf32>, vector<24x96xf32> -> vector<24x96xf32>
    %c0_57 = arith.constant 0 : index
    %c0_58 = arith.constant 0 : index
    %257 = vector.load %arg10[%c0_57, %c0_58] : memref<1x96xf32, #tpu.memory_space<vmem>>, vector<1x96xf32>
    %258 = vector.broadcast %257 : vector<1x96xf32> to vector<24x96xf32>
    %259 = arith.addf %256, %258 : vector<24x96xf32>
    %c0_59 = arith.constant 0 : index
    %c0_60 = arith.constant 0 : index
    %260 = vector.load %arg2[%c0_59, %c0_60] : memref<8x1xf32, #tpu.memory_space<vmem>>, vector<8x1xf32>
    %261 = vector.extract_strided_slice %259 {offsets = [0, 0], sizes = [8, 96], strides = [1, 1]} : vector<24x96xf32> to vector<8x96xf32>
    %262 = vector.broadcast %260 : vector<8x1xf32> to vector<8x96xf32>
    %263 = vector.broadcast %249 : vector<1x96xf32> to vector<8x96xf32>
    %264 = arith.mulf %262, %263 : vector<8x96xf32>
    %265 = arith.addf %261, %264 : vector<8x96xf32>
    %cst_61 = arith.constant dense<0.000000e+00> : vector<8x96xf32>
    %266 = tpu.matmul %248, %250, %cst_61 {dimension_numbers = #tpu.dot_dimension_numbers<[1], [0], [0], [1], [0, 0, 1, 1], [], []>} : vector<8x32xf32>, vector<32x96xf32>, vector<8x96xf32> -> vector<8x96xf32>
    %267 = vector.extract_strided_slice %265 {offsets = [0, 0], sizes = [8, 32], strides = [1, 1]} : vector<8x96xf32> to vector<8x32xf32>
    %268 = vector.extract_strided_slice %266 {offsets = [0, 0], sizes = [8, 32], strides = [1, 1]} : vector<8x96xf32> to vector<8x32xf32>
    %269 = arith.addf %267, %268 : vector<8x32xf32>
    %270 = arith.negf %269 : vector<8x32xf32>
    %271 = math.exp %270 : vector<8x32xf32>
    %cst_62 = arith.constant 1.000000e+00 : f32
    %272 = vector.broadcast %cst_62 : f32 to vector<8x32xf32>
    %273 = arith.addf %272, %271 : vector<8x32xf32>
    %274 = arith.divf %272, %273 : vector<8x32xf32>
    %275 = vector.extract_strided_slice %265 {offsets = [0, 32], sizes = [8, 32], strides = [1, 1]} : vector<8x96xf32> to vector<8x32xf32>
    %276 = vector.extract_strided_slice %266 {offsets = [0, 32], sizes = [8, 32], strides = [1, 1]} : vector<8x96xf32> to vector<8x32xf32>
    %277 = arith.addf %275, %276 : vector<8x32xf32>
    %278 = arith.negf %277 : vector<8x32xf32>
    %279 = math.exp %278 : vector<8x32xf32>
    %cst_63 = arith.constant 1.000000e+00 : f32
    %280 = vector.broadcast %cst_63 : f32 to vector<8x32xf32>
    %281 = arith.addf %280, %279 : vector<8x32xf32>
    %282 = arith.divf %280, %281 : vector<8x32xf32>
    %283 = vector.extract_strided_slice %265 {offsets = [0, 64], sizes = [8, 32], strides = [1, 1]} : vector<8x96xf32> to vector<8x32xf32>
    %284 = vector.extract_strided_slice %266 {offsets = [0, 64], sizes = [8, 32], strides = [1, 1]} : vector<8x96xf32> to vector<8x32xf32>
    %285 = vector.broadcast %251 : vector<1x32xf32> to vector<8x32xf32>
    %286 = arith.addf %284, %285 : vector<8x32xf32>
    %287 = arith.mulf %274, %286 : vector<8x32xf32>
    %288 = arith.addf %283, %287 : vector<8x32xf32>
    %289 = math.tanh %288 : vector<8x32xf32>
    %cst_64 = arith.constant 1.000000e+00 : f32
    %290 = vector.broadcast %cst_64 : f32 to vector<8x32xf32>
    %291 = arith.subf %290, %282 : vector<8x32xf32>
    %292 = arith.mulf %291, %289 : vector<8x32xf32>
    %293 = arith.mulf %282, %248 : vector<8x32xf32>
    %294 = arith.addf %292, %293 : vector<8x32xf32>
    %cst_65 = arith.constant dense<0.000000e+00> : vector<8x1xf32>
    %295 = tpu.matmul %294, %252, %cst_65 {dimension_numbers = #tpu.dot_dimension_numbers<[1], [0], [0], [1], [0, 0, 1, 1], [], []>} : vector<8x32xf32>, vector<32x1xf32>, vector<8x1xf32> -> vector<8x1xf32>
    %296 = vector.broadcast %253 : vector<1x1xf32> to vector<8x1xf32>
    %297 = arith.addf %295, %296 : vector<8x1xf32>
    %c0_66 = arith.constant 0 : index
    %c0_67 = arith.constant 0 : index
    %298 = vector.load %arg14[%c0_66, %c0_67] : memref<8x3xf32, #tpu.memory_space<vmem>>, vector<8x1xf32>
    tpu.vector_store %arg14[%c0_66, %c0_67], %297 {strides = array<i32>} : memref<8x3xf32, #tpu.memory_space<vmem>>, vector<8x1xf32>,
    %299 = vector.extract_strided_slice %259 {offsets = [8, 0], sizes = [8, 96], strides = [1, 1]} : vector<24x96xf32> to vector<8x96xf32>
    %300 = vector.broadcast %297 : vector<8x1xf32> to vector<8x96xf32>
    %301 = vector.broadcast %249 : vector<1x96xf32> to vector<8x96xf32>
    %302 = arith.mulf %300, %301 : vector<8x96xf32>
    %303 = arith.addf %299, %302 : vector<8x96xf32>
    %cst_68 = arith.constant dense<0.000000e+00> : vector<8x96xf32>
    %304 = tpu.matmul %294, %250, %cst_68 {dimension_numbers = #tpu.dot_dimension_numbers<[1], [0], [0], [1], [0, 0, 1, 1], [], []>} : vector<8x32xf32>, vector<32x96xf32>, vector<8x96xf32> -> vector<8x96xf32>
    %305 = vector.extract_strided_slice %303 {offsets = [0, 0], sizes = [8, 32], strides = [1, 1]} : vector<8x96xf32> to vector<8x32xf32>
    %306 = vector.extract_strided_slice %304 {offsets = [0, 0], sizes = [8, 32], strides = [1, 1]} : vector<8x96xf32> to vector<8x32xf32>
    %307 = arith.addf %305, %306 : vector<8x32xf32>
    %308 = arith.negf %307 : vector<8x32xf32>
    %309 = math.exp %308 : vector<8x32xf32>
    %cst_69 = arith.constant 1.000000e+00 : f32
    %310 = vector.broadcast %cst_69 : f32 to vector<8x32xf32>
    %311 = arith.addf %310, %309 : vector<8x32xf32>
    %312 = arith.divf %310, %311 : vector<8x32xf32>
    %313 = vector.extract_strided_slice %303 {offsets = [0, 32], sizes = [8, 32], strides = [1, 1]} : vector<8x96xf32> to vector<8x32xf32>
    %314 = vector.extract_strided_slice %304 {offsets = [0, 32], sizes = [8, 32], strides = [1, 1]} : vector<8x96xf32> to vector<8x32xf32>
    %315 = arith.addf %313, %314 : vector<8x32xf32>
    %316 = arith.negf %315 : vector<8x32xf32>
    %317 = math.exp %316 : vector<8x32xf32>
    %cst_70 = arith.constant 1.000000e+00 : f32
    %318 = vector.broadcast %cst_70 : f32 to vector<8x32xf32>
    %319 = arith.addf %318, %317 : vector<8x32xf32>
    %320 = arith.divf %318, %319 : vector<8x32xf32>
    %321 = vector.extract_strided_slice %303 {offsets = [0, 64], sizes = [8, 32], strides = [1, 1]} : vector<8x96xf32> to vector<8x32xf32>
    %322 = vector.extract_strided_slice %304 {offsets = [0, 64], sizes = [8, 32], strides = [1, 1]} : vector<8x96xf32> to vector<8x32xf32>
    %323 = vector.broadcast %251 : vector<1x32xf32> to vector<8x32xf32>
    %324 = arith.addf %322, %323 : vector<8x32xf32>
    %325 = arith.mulf %312, %324 : vector<8x32xf32>
    %326 = arith.addf %321, %325 : vector<8x32xf32>
    %327 = math.tanh %326 : vector<8x32xf32>
    %cst_71 = arith.constant 1.000000e+00 : f32
    %328 = vector.broadcast %cst_71 : f32 to vector<8x32xf32>
    %329 = arith.subf %328, %320 : vector<8x32xf32>
    %330 = arith.mulf %329, %327 : vector<8x32xf32>
    %331 = arith.mulf %320, %294 : vector<8x32xf32>
    %332 = arith.addf %330, %331 : vector<8x32xf32>
    %cst_72 = arith.constant dense<0.000000e+00> : vector<8x1xf32>
    %333 = tpu.matmul %332, %252, %cst_72 {dimension_numbers = #tpu.dot_dimension_numbers<[1], [0], [0], [1], [0, 0, 1, 1], [], []>} : vector<8x32xf32>, vector<32x1xf32>, vector<8x1xf32> -> vector<8x1xf32>
    %334 = vector.broadcast %253 : vector<1x1xf32> to vector<8x1xf32>
    %335 = arith.addf %333, %334 : vector<8x1xf32>
    %c0_73 = arith.constant 0 : index
    %c1 = arith.constant 1 : index
    %336 = vector.load %arg14[%c0_73, %c1] : memref<8x3xf32, #tpu.memory_space<vmem>>, vector<8x1xf32>
    tpu.vector_store %arg14[%c0_73, %c1], %335 {strides = array<i32>} : memref<8x3xf32, #tpu.memory_space<vmem>>, vector<8x1xf32>,
    %337 = vector.extract_strided_slice %259 {offsets = [16, 0], sizes = [8, 96], strides = [1, 1]} : vector<24x96xf32> to vector<8x96xf32>
    %338 = vector.broadcast %335 : vector<8x1xf32> to vector<8x96xf32>
    %339 = vector.broadcast %249 : vector<1x96xf32> to vector<8x96xf32>
    %340 = arith.mulf %338, %339 : vector<8x96xf32>
    %341 = arith.addf %337, %340 : vector<8x96xf32>
    %cst_74 = arith.constant dense<0.000000e+00> : vector<8x96xf32>
    %342 = tpu.matmul %332, %250, %cst_74 {dimension_numbers = #tpu.dot_dimension_numbers<[1], [0], [0], [1], [0, 0, 1, 1], [], []>} : vector<8x32xf32>, vector<32x96xf32>, vector<8x96xf32> -> vector<8x96xf32>
    %343 = vector.extract_strided_slice %341 {offsets = [0, 0], sizes = [8, 32], strides = [1, 1]} : vector<8x96xf32> to vector<8x32xf32>
    %344 = vector.extract_strided_slice %342 {offsets = [0, 0], sizes = [8, 32], strides = [1, 1]} : vector<8x96xf32> to vector<8x32xf32>
    %345 = arith.addf %343, %344 : vector<8x32xf32>
    %346 = arith.negf %345 : vector<8x32xf32>
    %347 = math.exp %346 : vector<8x32xf32>
    %cst_75 = arith.constant 1.000000e+00 : f32
    %348 = vector.broadcast %cst_75 : f32 to vector<8x32xf32>
    %349 = arith.addf %348, %347 : vector<8x32xf32>
    %350 = arith.divf %348, %349 : vector<8x32xf32>
    %351 = vector.extract_strided_slice %341 {offsets = [0, 32], sizes = [8, 32], strides = [1, 1]} : vector<8x96xf32> to vector<8x32xf32>
    %352 = vector.extract_strided_slice %342 {offsets = [0, 32], sizes = [8, 32], strides = [1, 1]} : vector<8x96xf32> to vector<8x32xf32>
    %353 = arith.addf %351, %352 : vector<8x32xf32>
    %354 = arith.negf %353 : vector<8x32xf32>
    %355 = math.exp %354 : vector<8x32xf32>
    %cst_76 = arith.constant 1.000000e+00 : f32
    %356 = vector.broadcast %cst_76 : f32 to vector<8x32xf32>
    %357 = arith.addf %356, %355 : vector<8x32xf32>
    %358 = arith.divf %356, %357 : vector<8x32xf32>
    %359 = vector.extract_strided_slice %341 {offsets = [0, 64], sizes = [8, 32], strides = [1, 1]} : vector<8x96xf32> to vector<8x32xf32>
    %360 = vector.extract_strided_slice %342 {offsets = [0, 64], sizes = [8, 32], strides = [1, 1]} : vector<8x96xf32> to vector<8x32xf32>
    %361 = vector.broadcast %251 : vector<1x32xf32> to vector<8x32xf32>
    %362 = arith.addf %360, %361 : vector<8x32xf32>
    %363 = arith.mulf %350, %362 : vector<8x32xf32>
    %364 = arith.addf %359, %363 : vector<8x32xf32>
    %365 = math.tanh %364 : vector<8x32xf32>
    %cst_77 = arith.constant 1.000000e+00 : f32
    %366 = vector.broadcast %cst_77 : f32 to vector<8x32xf32>
    %367 = arith.subf %366, %358 : vector<8x32xf32>
    %368 = arith.mulf %367, %365 : vector<8x32xf32>
    %369 = arith.mulf %358, %332 : vector<8x32xf32>
    %370 = arith.addf %368, %369 : vector<8x32xf32>
    %cst_78 = arith.constant dense<0.000000e+00> : vector<8x1xf32>
    %371 = tpu.matmul %370, %252, %cst_78 {dimension_numbers = #tpu.dot_dimension_numbers<[1], [0], [0], [1], [0, 0, 1, 1], [], []>} : vector<8x32xf32>, vector<32x1xf32>, vector<8x1xf32> -> vector<8x1xf32>
    %372 = vector.broadcast %253 : vector<1x1xf32> to vector<8x1xf32>
    %373 = arith.addf %371, %372 : vector<8x1xf32>
    %c0_79 = arith.constant 0 : index
    %c2 = arith.constant 2 : index
    %374 = vector.load %arg14[%c0_79, %c2] : memref<8x3xf32, #tpu.memory_space<vmem>>, vector<8x1xf32>
    tpu.vector_store %arg14[%c0_79, %c2], %373 {strides = array<i32>} : memref<8x3xf32, #tpu.memory_space<vmem>>, vector<8x1xf32>,
    return
  }
}

</mosaic_0001>

<llo_original>
// kernel: tpu_custom_call.1
$region0: #{tpu_custom_call.1}
  #allocation0 [shape = 'u32[]', space=smem, size = 0x4, offset = 0x4, fixed_abs, tag = 'smem constant byte address 0x4 - core index']
  #allocation1 [shape = 'u32[144,128]{1,0:T(1,128)}', space=vmem, size = 0x12000, scoped, tag = 'internal scratch']
  #allocation2 [shape = 'f32[1,1]{1,0:T(1,128)S(1)}', space=vmem, size = 0x200, scoped, tag = 'scoped memory for tpu_custom_call.1']
  %s0 = inlined_call_operand.vmem [shape: f32[64,4], index: 0, kind: input, shape index: {}]
  %s1 = inlined_call_operand.vmem [shape: f32[24,4], index: 1, kind: input, shape index: {}]
  %s2 = inlined_call_operand.vmem [shape: f32[8,1], index: 2, kind: input, shape index: {}]
  %s3 = inlined_call_operand.vmem [shape: f32[4,96], index: 3, kind: input, shape index: {}]
  %s4 = inlined_call_operand.vmem [shape: f32[32,96], index: 4, kind: input, shape index: {}]
  %s5 = inlined_call_operand.vmem [shape: f32[1,96], index: 5, kind: input, shape index: {}]
  %s6 = inlined_call_operand.vmem [shape: f32[1,32], index: 6, kind: input, shape index: {}]
  %s7 = inlined_call_operand.vmem [shape: f32[1,96], index: 7, kind: input, shape index: {}]
  %s8 = inlined_call_operand.vmem [shape: f32[4,96], index: 8, kind: input, shape index: {}]
  %s9 = inlined_call_operand.vmem [shape: f32[32,96], index: 9, kind: input, shape index: {}]
  %s10 = inlined_call_operand.vmem [shape: f32[1,96], index: 10, kind: input, shape index: {}]
  %s11 = inlined_call_operand.vmem [shape: f32[1,32], index: 11, kind: input, shape index: {}]
  %s12 = inlined_call_operand.vmem [shape: f32[32,1], index: 12, kind: input, shape index: {}]
  %s13 = inlined_call_operand.<no memory space> [shape: f32[1,1], index: 13, kind: input, shape index: {}]
  %s14 = inlined_call_operand.vmem [shape: f32[8,3], index: 14, kind: output, shape index: {}]
  %s15 = sld [smem:[#allocation0]]
  $region66: #{tpu_custom_call.1} parent=0
    _
  %s17 = ssub.s32 1, %s15
  %s18 = scalar_select 0, %s17, %s15
  %v19 = vstv %s13
  %20 = vst [vmem:[#allocation2] sm:$0x1] %v19
  // Predicated region
  $region2: #{tpu_custom_call.1} parent=0 // pred_check
    _
  $region3: #{tpu_custom_call.1} parent=0 // pred_check_branch
    %22 = sbr.rel (0) target = $region5
  $region4: #{tpu_custom_call.1} parent=0 // pred_region
    _
  $region5: #{tpu_custom_call.1} parent=0 // pred_fallthru
    _
  // Predicated region
  $region6: #{tpu_custom_call.1} parent=0 // pred_check
    _
  $region7: #{tpu_custom_call.1} parent=0 // pred_check_branch
    %24 = sbr.rel (0) target = $region9
  $region8: #{tpu_custom_call.1} parent=0 // pred_region
    _
  $region9: #{tpu_custom_call.1} parent=0 // pred_fallthru
    _
  // Predicated region
  $region10: #{tpu_custom_call.1} parent=0 // pred_check
    _
  $region11: #{tpu_custom_call.1} parent=0 // pred_check_branch
    %26 = sbr.rel (0) target = $region13
  $region12: #{tpu_custom_call.1} parent=0 // pred_region
    _
  $region13: #{tpu_custom_call.1} parent=0 // pred_fallthru
    _
  // Predicated region
  $region14: #{tpu_custom_call.1} parent=0 // pred_check
    _
  $region15: #{tpu_custom_call.1} parent=0 // pred_check_branch
    %28 = sbr.rel (0) target = $region17
  $region16: #{tpu_custom_call.1} parent=0 // pred_region
    _
  $region17: #{tpu_custom_call.1} parent=0 // pred_fallthru
    _
  // Predicated region
  $region18: #{tpu_custom_call.1} parent=0 // pred_check
    _
  $region19: #{tpu_custom_call.1} parent=0 // pred_check_branch
    %30 = sbr.rel (0) target = $region21
  $region20: #{tpu_custom_call.1} parent=0 // pred_region
    _
  $region21: #{tpu_custom_call.1} parent=0 // pred_fallthru
    _
  // Predicated region
  $region22: #{tpu_custom_call.1} parent=0 // pred_check
    _
  $region23: #{tpu_custom_call.1} parent=0 // pred_check_branch
    %32 = sbr.rel (0) target = $region25
  $region24: #{tpu_custom_call.1} parent=0 // pred_region
    _
  $region25: #{tpu_custom_call.1} parent=0 // pred_fallthru
    _
  // Predicated region
  $region26: #{tpu_custom_call.1} parent=0 // pred_check
    _
  $region27: #{tpu_custom_call.1} parent=0 // pred_check_branch
    %34 = sbr.rel (0) target = $region29
  $region28: #{tpu_custom_call.1} parent=0 // pred_region
    _
  $region29: #{tpu_custom_call.1} parent=0 // pred_fallthru
    _
  // Predicated region
  $region30: #{tpu_custom_call.1} parent=0 // pred_check
    _
  $region31: #{tpu_custom_call.1} parent=0 // pred_check_branch
    %36 = sbr.rel (0) target = $region33
  $region32: #{tpu_custom_call.1} parent=0 // pred_region
    _
  $region33: #{tpu_custom_call.1} parent=0 // pred_fallthru
    _
  // Predicated region
  $region34: #{tpu_custom_call.1} parent=0 // pred_check
    _
  $region35: #{tpu_custom_call.1} parent=0 // pred_check_branch
    %38 = sbr.rel (0) target = $region37
  $region36: #{tpu_custom_call.1} parent=0 // pred_region
    _
  $region37: #{tpu_custom_call.1} parent=0 // pred_fallthru
    _
  // Predicated region
  $region38: #{tpu_custom_call.1} parent=0 // pred_check
    _
  $region39: #{tpu_custom_call.1} parent=0 // pred_check_branch
    %40 = sbr.rel (0) target = $region41
  $region40: #{tpu_custom_call.1} parent=0 // pred_region
    _
  $region41: #{tpu_custom_call.1} parent=0 // pred_fallthru
    _
  // Predicated region
  $region42: #{tpu_custom_call.1} parent=0 // pred_check
    _
  $region43: #{tpu_custom_call.1} parent=0 // pred_check_branch
    %42 = sbr.rel (0) target = $region45
  $region44: #{tpu_custom_call.1} parent=0 // pred_region
    _
  $region45: #{tpu_custom_call.1} parent=0 // pred_fallthru
    _
  // Predicated region
  $region46: #{tpu_custom_call.1} parent=0 // pred_check
    _
  $region47: #{tpu_custom_call.1} parent=0 // pred_check_branch
    %44 = sbr.rel (0) target = $region49
  $region48: #{tpu_custom_call.1} parent=0 // pred_region
    _
  $region49: #{tpu_custom_call.1} parent=0 // pred_fallthru
    _
  // Predicated region
  $region50: #{tpu_custom_call.1} parent=0 // pred_check
    _
  $region51: #{tpu_custom_call.1} parent=0 // pred_check_branch
    %46 = sbr.rel (0) target = $region53
  $region52: #{tpu_custom_call.1} parent=0 // pred_region
    _
  $region53: #{tpu_custom_call.1} parent=0 // pred_fallthru
    _
  // Predicated region
  $region54: #{tpu_custom_call.1} parent=0 // pred_check
    _
  $region55: #{tpu_custom_call.1} parent=0 // pred_check_branch
    %48 = sbr.rel (0) target = $region57
  $region56: #{tpu_custom_call.1} parent=0 // pred_region
    _
  $region57: #{tpu_custom_call.1} parent=0 // pred_fallthru
    _
  %v49 = vld [vmem:[%s4] sm:$0xff]
  %v50 = vld [vmem:[%s4 + $0x8] sm:$0xff]
  %v51 = vld [vmem:[%s4 + $0x10] sm:$0xff]
  %v52 = vld [vmem:[%s4 + $0x18] sm:$0xff]
  %v53 = vld [vmem:[%s6] sm:$0x1]
  %v54 = vld [vmem:[%s0] sm:$0xff]
  %v55 = vld [vmem:[%s0 + $0x8] sm:$0xff]
  %v56 = vld [vmem:[%s0 + $0x10] sm:$0xff]
  %v57 = vld [vmem:[%s0 + $0x18] sm:$0xff]
  %v58 = vld [vmem:[%s0 + $0x20] sm:$0xff]
  %v59 = vld [vmem:[%s0 + $0x28] sm:$0xff]
  %v60 = vld [vmem:[%s0 + $0x30] sm:$0xff]
  %v61 = vld [vmem:[%s0 + $0x38] sm:$0xff]
  %v62 = vld [vmem:[%s3] sm:$0xf]
  %v63 = vld [vmem:[%s5] sm:$0x1]
  %v65 = vlaneseq
  %v66 = vshrl.u32 %v65, 7
  %v67 = vsub.s32 0, %v66
  %v68 = vrot.slane %v63, %v67
  %vm70 = vcmask 31744
  %v72 = vsel %vm70, %v54, 0
  %v75 = vsel %vm70, %v55, 0
  %v78 = vsel %vm70, %v56, 0
  %v81 = vsel %vm70, %v57, 0
  %v84 = vsel %vm70, %v58, 0
  %v87 = vsel %vm70, %v59, 0
  %v90 = vsel %vm70, %v60, 0
  %v93 = vsel %vm70, %v61, 0
  %vm95 = vcmask 1043456
  %v97 = vsel %vm95, %v62, 0
  %99 = vmatprep.subr.mxu0 0.0
  %100 = vmatpush1.msra.mxu0 %v97
  %101 = vmatprep.subr.mxu0 0.0
  %102 = vmatpush1.msra.mxu0 0.0
  %103 = vmatprep.subr.mxu0 0.0
  %104 = vmatpush1.msra.mxu0 0.0
  %105 = vmatprep.subr.mxu0 0.0
  %106 = vmatpush1.msra.mxu0 0.0
  %107 = vmatprep.subr.mxu0 0.0
  %108 = vmatpush1.msra.mxu0 0.0
  %109 = vmatprep.subr.mxu0 0.0
  %110 = vmatpush1.msra.mxu0 0.0
  %111 = vmatprep.subr.mxu0 0.0
  %112 = vmatpush1.msra.mxu0 0.0
  %113 = vmatprep.subr.mxu0 0.0
  %114 = vmatpush1.msra.mxu0 0.0
  %115 = vmatprep.subr.mxu0 0.0
  %116 = vmatpush1.msra.mxu0 0.0
  %117 = vmatprep.subr.mxu0 0.0
  %118 = vmatpush1.msra.mxu0 0.0
  %119 = vmatprep.subr.mxu0 0.0
  %120 = vmatpush1.msra.mxu0 0.0
  %121 = vmatprep.subr.mxu0 0.0
  %122 = vmatpush1.msra.mxu0 0.0
  %123 = vmatprep.subr.mxu0 0.0
  %124 = vmatpush1.msra.mxu0 0.0
  %125 = vmatprep.subr.mxu0 0.0
  %126 = vmatpush1.msra.mxu0 0.0
  %127 = vmatprep.subr.mxu0 0.0
  %128 = vmatpush1.msra.mxu0 0.0
  %129 = vmatprep.subr.mxu0 0.0
  %130 = vmatpush1.msra.mxu0 0.0
  %131 = vmatprep.subr.mxu0 0.0
  %132 = vmatpush1.msra.mxu0 0.0
  %133 = vmatprep.subr.mxu0 0.0
  %134 = vmatpush1.msra.mxu0 0.0
  %135 = vmatprep.subr.mxu0 0.0
  %136 = vmatpush1.msra.mxu0 0.0
  %137 = vmatprep.subr.mxu0 0.0
  %138 = vmatpush1.msra.mxu0 0.0
  %139 = vmatprep.subr.mxu0 0.0
  %140 = vmatpush1.msra.mxu0 0.0
  %141 = vmatprep.subr.mxu0 0.0
  %142 = vmatpush1.msra.mxu0 0.0
  %143 = vmatprep.subr.mxu0 0.0
  %144 = vmatpush1.msra.mxu0 0.0
  %145 = vmatprep.subr.mxu0 0.0
  %146 = vmatpush1.msra.mxu0 0.0
  %147 = vmatprep.subr.mxu0 0.0
  %148 = vmatpush1.msra.mxu0 0.0
  %149 = vmatprep.subr.mxu0 0.0
  %150 = vmatpush1.msra.mxu0 0.0
  %151 = vmatprep.subr.mxu0 0.0
  %152 = vmatpush1.msra.mxu0 0.0
  %153 = vmatprep.subr.mxu0 0.0
  %154 = vmatpush1.msra.mxu0 0.0
  %155 = vmatprep.subr.mxu0 0.0
  %156 = vmatpush1.msra.mxu0 0.0
  %157 = vmatprep.subr.mxu0 0.0
  %158 = vmatpush1.msra.mxu0 0.0
  %159 = vmatprep.subr.mxu0 0.0
  %160 = vmatpush1.msra.mxu0 0.0
  %161 = vmatprep.subr.mxu0 0.0
  %162 = vmatpush1.msra.mxu0 0.0
  %163 = vmatprep.mubr.f32.mxu0 0.0
  %164 = vmatmul.mubr.f32.gmra.mrb[0].mxu0 %v72
  %v165 = vpop.f32.mrb[0].mxu0
  %v166 = vadd.f32 %v68, %v165
  %v167 = vpop.f32.mrb[0].mxu0
  %168 = vmatprep.mubr.f32.mxu0 0.0
  %169 = vmatmul.mubr.f32.gmra.mrb[0].mxu0 %v75
  %v170 = vpop.f32.mrb[0].mxu0
  %v171 = vadd.f32 %v68, %v170
  %v172 = vpop.f32.mrb[0].mxu0
  %173 = vmatprep.mubr.f32.mxu0 0.0
  %174 = vmatmul.mubr.f32.gmra.mrb[0].mxu0 %v78
  %v175 = vpop.f32.mrb[0].mxu0
  %v176 = vadd.f32 %v68, %v175
  %v177 = vpop.f32.mrb[0].mxu0
  %178 = vmatprep.mubr.f32.mxu0 0.0
  %179 = vmatmul.mubr.f32.gmra.mrb[0].mxu0 %v81
  %v180 = vpop.f32.mrb[0].mxu0
  %v181 = vadd.f32 %v68, %v180
  %v182 = vpop.f32.mrb[0].mxu0
  %183 = vmatprep.mubr.f32.mxu0 0.0
  %184 = vmatmul.mubr.f32.gmra.mrb[0].mxu0 %v84
  %v185 = vpop.f32.mrb[0].mxu0
  %v186 = vadd.f32 %v68, %v185
  %v187 = vpop.f32.mrb[0].mxu0
  %188 = vmatprep.mubr.f32.mxu0 0.0
  %189 = vmatmul.mubr.f32.gmra.mrb[0].mxu0 %v87
  %v190 = vpop.f32.mrb[0].mxu0
  %v191 = vadd.f32 %v68, %v190
  %v192 = vpop.f32.mrb[0].mxu0
  %193 = vmatprep.mubr.f32.mxu0 0.0
  %194 = vmatmul.mubr.f32.gmra.mrb[0].mxu0 %v90
  %v195 = vpop.f32.mrb[0].mxu0
  %v196 = vadd.f32 %v68, %v195
  %v197 = vpop.f32.mrb[0].mxu0
  %198 = vmatprep.mubr.f32.mxu0 0.0
  %199 = vmatmul.mubr.f32.gmra.mrb[0].mxu0 %v93
  %v200 = vpop.f32.mrb[0].mxu0
  %v201 = vadd.f32 %v68, %v200
  %v202 = vpop.f32.mrb[0].mxu0
  %203 = vdwg.mxu0
  %vm204 = vcmask 261120
  %v206 = vsel %vm204, 0.0, 0
  %208 = vmatprep.subr.mxu0 0.0
  %209 = vmatpush1.msra.mxu0 %v49
  %210 = vmatprep.subr.mxu0 0.0
  %211 = vmatpush1.msra.mxu0 %v50
  %212 = vmatprep.subr.mxu0 0.0
  %213 = vmatpush1.msra.mxu0 %v51
  %214 = vmatprep.subr.mxu0 0.0
  %215 = vmatpush1.msra.mxu0 %v52
  %216 = vmatprep.subr.mxu0 0.0
  %217 = vmatpush1.msra.mxu0 0.0
  %218 = vmatprep.subr.mxu0 0.0
  %219 = vmatpush1.msra.mxu0 0.0
  %220 = vmatprep.subr.mxu0 0.0
  %221 = vmatpush1.msra.mxu0 0.0
  %222 = vmatprep.subr.mxu0 0.0
  %223 = vmatpush1.msra.mxu0 0.0
  %224 = vmatprep.subr.mxu0 0.0
  %225 = vmatpush1.msra.mxu0 0.0
  %226 = vmatprep.subr.mxu0 0.0
  %227 = vmatpush1.msra.mxu0 0.0
  %228 = vmatprep.subr.mxu0 0.0
  %229 = vmatpush1.msra.mxu0 0.0
  %230 = vmatprep.subr.mxu0 0.0
  %231 = vmatpush1.msra.mxu0 0.0
  %232 = vmatprep.subr.mxu0 0.0
  %233 = vmatpush1.msra.mxu0 0.0
  %234 = vmatprep.subr.mxu0 0.0
  %235 = vmatpush1.msra.mxu0 0.0
  %236 = vmatprep.subr.mxu0 0.0
  %237 = vmatpush1.msra.mxu0 0.0
  %238 = vmatprep.subr.mxu0 0.0
  %239 = vmatpush1.msra.mxu0 0.0
  %240 = vmatprep.subr.mxu0 0.0
  %241 = vmatpush1.msra.mxu0 0.0
  %242 = vmatprep.subr.mxu0 0.0
  %243 = vmatpush1.msra.mxu0 0.0
  %244 = vmatprep.subr.mxu0 0.0
  %245 = vmatpush1.msra.mxu0 0.0
  %246 = vmatprep.subr.mxu0 0.0
  %247 = vmatpush1.msra.mxu0 0.0
  %248 = vmatprep.subr.mxu0 0.0
  %249 = vmatpush1.msra.mxu0 0.0
  %250 = vmatprep.subr.mxu0 0.0
  %251 = vmatpush1.msra.mxu0 0.0
  %252 = vmatprep.subr.mxu0 0.0
  %253 = vmatpush1.msra.mxu0 0.0
  %254 = vmatprep.subr.mxu0 0.0
  %255 = vmatpush1.msra.mxu0 0.0
  %256 = vmatprep.subr.mxu0 0.0
  %257 = vmatpush1.msra.mxu0 0.0
  %258 = vmatprep.subr.mxu0 0.0
  %259 = vmatpush1.msra.mxu0 0.0
  %260 = vmatprep.subr.mxu0 0.0
  %261 = vmatpush1.msra.mxu0 0.0
  %262 = vmatprep.subr.mxu0 0.0
  %263 = vmatpush1.msra.mxu0 0.0
  %264 = vmatprep.subr.mxu0 0.0
  %265 = vmatpush1.msra.mxu0 0.0
  %266 = vmatprep.subr.mxu0 0.0
  %267 = vmatpush1.msra.mxu0 0.0
  %268 = vmatprep.subr.mxu0 0.0
  %269 = vmatpush1.msra.mxu0 0.0
  %270 = vmatprep.subr.mxu0 0.0
  %271 = vmatpush1.msra.mxu0 0.0
  %272 = vmatprep.mubr.f32.mxu0 0.0
  %273 = vmatmul.mubr.f32.gmra.mrb[0].mxu0 %v206
  %v274 = vpop.f32.mrb[0].mxu0
  %v275 = vadd.f32 0.0, %v274
  %v276 = vpop.f32.mrb[0].mxu0
  %277 = vdwg.mxu0
  %v278 = vadd.f32 %v166, %v275
  %v279 = vxor.u32 %v278, 2147483648
  %v280 = vmul.f32 %v279, 1.442695
  %v281 = vpow.pop %v280
  %v282 = vadd.f32 %v281, 1.0
  %v283 = vrcp.pop %v282
  %v284 = vmul.f32 1.0, %v283
  %v286 = vlaneseq
  %v287 = vshrl.u32 %v286, 7
  %v288 = vsub.s32 0, %v287
  %v289 = vrot.slane %v53, %v288
  %290 = vrot.lane.b32.xlu0 %v289, 64
  %v291 = vpop.permute.xlu0 %290
  %v293 = vadd.f32 %v275, %v291
  %295 = vrot.lane.b32.xlu0 %v293, 64
  %v296 = vpop.permute.xlu0 %295
  %v298 = vmul.f32 %v284, %v296
  %300 = vrot.lane.b32.xlu0 %v298, 64
  %v301 = vpop.permute.xlu0 %300
  %v303 = vadd.f32 %v166, %v301
  %v304 = vtanh.pop %v303
  %v305 = vsub.f32 1.0, %v284
  %307 = vrot.lane.b32.xlu0 %v304, 96
  %v308 = vpop.permute.xlu0 %307
  %v310 = vmul.f32 %v305, %v308
  %v311 = vmul.f32 %v284, 0.0
  %v312 = vadd.f32 %v310, %v311
  %314 = vrot.lane.b32.xlu0 %v312, 96
  %v315 = vpop.permute.xlu0 %314
  %v316 = vsel %vm204, %v315, 0
  %318 = vmatprep.subr.mxu0 0.0
  %319 = vmatpush1.msra.mxu0 %v49
  %320 = vmatprep.subr.mxu0 0.0
  %321 = vmatpush1.msra.mxu0 %v50
  %322 = vmatprep.subr.mxu0 0.0
  %323 = vmatpush1.msra.mxu0 %v51
  %324 = vmatprep.subr.mxu0 0.0
  %325 = vmatpush1.msra.mxu0 %v52
  %326 = vmatprep.subr.mxu0 0.0
  %327 = vmatpush1.msra.mxu0 0.0
  %328 = vmatprep.subr.mxu0 0.0
  %329 = vmatpush1.msra.mxu0 0.0
  %330 = vmatprep.subr.mxu0 0.0
  %331 = vmatpush1.msra.mxu0 0.0
  %332 = vmatprep.subr.mxu0 0.0
  %333 = vmatpush1.msra.mxu0 0.0
  %334 = vmatprep.subr.mxu0 0.0
  %335 = vmatpush1.msra.mxu0 0.0
  %336 = vmatprep.subr.mxu0 0.0
  %337 = vmatpush1.msra.mxu0 0.0
  %338 = vmatprep.subr.mxu0 0.0
  %339 = vmatpush1.msra.mxu0 0.0
  %340 = vmatprep.subr.mxu0 0.0
  %341 = vmatpush1.msra.mxu0 0.0
  %342 = vmatprep.subr.mxu0 0.0
  %343 = vmatpush1.msra.mxu0 0.0
  %344 = vmatprep.subr.mxu0 0.0
  %345 = vmatpush1.msra.mxu0 0.0
  %346 = vmatprep.subr.mxu0 0.0
  %347 = vmatpush1.msra.mxu0 0.0
  %348 = vmatprep.subr.mxu0 0.0
  %349 = vmatpush1.msra.mxu0 0.0
  %350 = vmatprep.subr.mxu0 0.0
  %351 = vmatpush1.msra.mxu0 0.0
  %352 = vmatprep.subr.mxu0 0.0
  %353 = vmatpush1.msra.mxu0 0.0
  %354 = vmatprep.subr.mxu0 0.0
  %355 = vmatpush1.msra.mxu0 0.0
  %356 = vmatprep.subr.mxu0 0.0
  %357 = vmatpush1.msra.mxu0 0.0
  %358 = vmatprep.subr.mxu0 0.0
  %359 = vmatpush1.msra.mxu0 0.0
  %360 = vmatprep.subr.mxu0 0.0
  %361 = vmatpush1.msra.mxu0 0.0
  %362 = vmatprep.subr.mxu0 0.0
  %363 = vmatpush1.msra.mxu0 0.0
  %364 = vmatprep.subr.mxu0 0.0
  %365 = vmatpush1.msra.mxu0 0.0
  %366 = vmatprep.subr.mxu0 0.0
  %367 = vmatpush1.msra.mxu0 0.0
  %368 = vmatprep.subr.mxu0 0.0
  %369 = vmatpush1.msra.mxu0 0.0
  %370 = vmatprep.subr.mxu0 0.0
  %371 = vmatpush1.msra.mxu0 0.0
  %372 = vmatprep.subr.mxu0 0.0
  %373 = vmatpush1.msra.mxu0 0.0
  %374 = vmatprep.subr.mxu0 0.0
  %375 = vmatpush1.msra.mxu0 0.0
  %376 = vmatprep.subr.mxu0 0.0
  %377 = vmatpush1.msra.mxu0 0.0
  %378 = vmatprep.subr.mxu0 0.0
  %379 = vmatpush1.msra.mxu0 0.0
  %380 = vmatprep.subr.mxu0 0.0
  %381 = vmatpush1.msra.mxu0 0.0
  %382 = vmatprep.mubr.f32.mxu0 0.0
  %383 = vmatmul.mubr.f32.gmra.mrb[0].mxu0 %v316
  %v384 = vpop.f32.mrb[0].mxu0
  %v385 = vadd.f32 0.0, %v384
  %v386 = vpop.f32.mrb[0].mxu0
  %387 = vdwg.mxu0
  %v388 = vadd.f32 %v171, %v385
  %v389 = vxor.u32 %v388, 2147483648
  %v390 = vmul.f32 %v389, 1.442695
  %v391 = vpow.pop %v390
  %v392 = vadd.f32 %v391, 1.0
  %v393 = vrcp.pop %v392
  %v394 = vmul.f32 1.0, %v393
  %v395 = vadd.f32 %v385, %v291
  %397 = vrot.lane.b32.xlu0 %v395, 64
  %v398 = vpop.permute.xlu0 %397
  %v400 = vmul.f32 %v394, %v398
  %402 = vrot.lane.b32.xlu0 %v400, 64
  %v403 = vpop.permute.xlu0 %402
  %v405 = vadd.f32 %v171, %v403
  %v406 = vtanh.pop %v405
  %v407 = vsub.f32 1.0, %v394
  %409 = vrot.lane.b32.xlu0 %v406, 96
  %v410 = vpop.permute.xlu0 %409
  %v412 = vmul.f32 %v407, %v410
  %v413 = vmul.f32 %v394, %v312
  %v414 = vadd.f32 %v412, %v413
  %416 = vrot.lane.b32.xlu0 %v414, 96
  %v417 = vpop.permute.xlu0 %416
  %v418 = vsel %vm204, %v417, 0
  %420 = vmatprep.subr.mxu0 0.0
  %421 = vmatpush1.msra.mxu0 %v49
  %422 = vmatprep.subr.mxu0 0.0
  %423 = vmatpush1.msra.mxu0 %v50
  %424 = vmatprep.subr.mxu0 0.0
  %425 = vmatpush1.msra.mxu0 %v51
  %426 = vmatprep.subr.mxu0 0.0
  %427 = vmatpush1.msra.mxu0 %v52
  %428 = vmatprep.subr.mxu0 0.0
  %429 = vmatpush1.msra.mxu0 0.0
  %430 = vmatprep.subr.mxu0 0.0
  %431 = vmatpush1.msra.mxu0 0.0
  %432 = vmatprep.subr.mxu0 0.0
  %433 = vmatpush1.msra.mxu0 0.0
  %434 = vmatprep.subr.mxu0 0.0
  %435 = vmatpush1.msra.mxu0 0.0
  %436 = vmatprep.subr.mxu0 0.0
  %437 = vmatpush1.msra.mxu0 0.0
  %438 = vmatprep.subr.mxu0 0.0
  %439 = vmatpush1.msra.mxu0 0.0
  %440 = vmatprep.subr.mxu0 0.0
  %441 = vmatpush1.msra.mxu0 0.0
  %442 = vmatprep.subr.mxu0 0.0
  %443 = vmatpush1.msra.mxu0 0.0
  %444 = vmatprep.subr.mxu0 0.0
  %445 = vmatpush1.msra.mxu0 0.0
  %446 = vmatprep.subr.mxu0 0.0
  %447 = vmatpush1.msra.mxu0 0.0
  %448 = vmatprep.subr.mxu0 0.0
  %449 = vmatpush1.msra.mxu0 0.0
  %450 = vmatprep.subr.mxu0 0.0
  %451 = vmatpush1.msra.mxu0 0.0
  %452 = vmatprep.subr.mxu0 0.0
  %453 = vmatpush1.msra.mxu0 0.0
  %454 = vmatprep.subr.mxu0 0.0
  %455 = vmatpush1.msra.mxu0 0.0
  %456 = vmatprep.subr.mxu0 0.0
  %457 = vmatpush1.msra.mxu0 0.0
  %458 = vmatprep.subr.mxu0 0.0
  %459 = vmatpush1.msra.mxu0 0.0
  %460 = vmatprep.subr.mxu0 0.0
  %461 = vmatpush1.msra.mxu0 0.0
  %462 = vmatprep.subr.mxu0 0.0
  %463 = vmatpush1.msra.mxu0 0.0
  %464 = vmatprep.subr.mxu0 0.0
  %465 = vmatpush1.msra.mxu0 0.0
  %466 = vmatprep.subr.mxu0 0.0
  %467 = vmatpush1.msra.mxu0 0.0
  %468 = vmatprep.subr.mxu0 0.0
  %469 = vmatpush1.msra.mxu0 0.0
  %470 = vmatprep.subr.mxu0 0.0
  %471 = vmatpush1.msra.mxu0 0.0
  %472 = vmatprep.subr.mxu0 0.0
  %473 = vmatpush1.msra.mxu0 0.0
  %474 = vmatprep.subr.mxu0 0.0
  %475 = vmatpush1.msra.mxu0 0.0
  %476 = vmatprep.subr.mxu0 0.0
  %477 = vmatpush1.msra.mxu0 0.0
  %478 = vmatprep.subr.mxu0 0.0
  %479 = vmatpush1.msra.mxu0 0.0
  %480 = vmatprep.subr.mxu0 0.0
  %481 = vmatpush1.msra.mxu0 0.0
  %482 = vmatprep.subr.mxu0 0.0
  %483 = vmatpush1.msra.mxu0 0.0
  %484 = vmatprep.mubr.f32.mxu0 0.0
  %485 = vmatmul.mubr.f32.gmra.mrb[0].mxu0 %v418
  %v486 = vpop.f32.mrb[0].mxu0
  %v487 = vadd.f32 0.0, %v486
  %v488 = vpop.f32.mrb[0].mxu0
  %489 = vdwg.mxu0
  %v490 = vadd.f32 %v176, %v487
  %v491 = vxor.u32 %v490, 2147483648
  %v492 = vmul.f32 %v491, 1.442695
  %v493 = vpow.pop %v492
  %v494 = vadd.f32 %v493, 1.0
  %v495 = vrcp.pop %v494
  %v496 = vmul.f32 1.0, %v495
  %v497 = vadd.f32 %v487, %v291
  %499 = vrot.lane.b32.xlu0 %v497, 64
  %v500 = vpop.permute.xlu0 %499
  %v502 = vmul.f32 %v496, %v500
  %504 = vrot.lane.b32.xlu0 %v502, 64
  %v505 = vpop.permute.xlu0 %504
  %v507 = vadd.f32 %v176, %v505
  %v508 = vtanh.pop %v507
  %v509 = vsub.f32 1.0, %v496
  %511 = vrot.lane.b32.xlu0 %v508, 96
  %v512 = vpop.permute.xlu0 %511
  %v514 = vmul.f32 %v509, %v512
  %v515 = vmul.f32 %v496, %v414
  %v516 = vadd.f32 %v514, %v515
  %518 = vrot.lane.b32.xlu0 %v516, 96
  %v519 = vpop.permute.xlu0 %518
  %v520 = vsel %vm204, %v519, 0
  %522 = vmatprep.subr.mxu0 0.0
  %523 = vmatpush1.msra.mxu0 %v49
  %524 = vmatprep.subr.mxu0 0.0
  %525 = vmatpush1.msra.mxu0 %v50
  %526 = vmatprep.subr.mxu0 0.0
  %527 = vmatpush1.msra.mxu0 %v51
  %528 = vmatprep.subr.mxu0 0.0
  %529 = vmatpush1.msra.mxu0 %v52
  %530 = vmatprep.subr.mxu0 0.0
  %531 = vmatpush1.msra.mxu0 0.0
  %532 = vmatprep.subr.mxu0 0.0
  %533 = vmatpush1.msra.mxu0 0.0
  %534 = vmatprep.subr.mxu0 0.0
  %535 = vmatpush1.msra.mxu0 0.0
  %536 = vmatprep.subr.mxu0 0.0
  %537 = vmatpush1.msra.mxu0 0.0
  %538 = vmatprep.subr.mxu0 0.0
  %539 = vmatpush1.msra.mxu0 0.0
  %540 = vmatprep.subr.mxu0 0.0
  %541 = vmatpush1.msra.mxu0 0.0
  %542 = vmatprep.subr.mxu0 0.0
  %543 = vmatpush1.msra.mxu0 0.0
  %544 = vmatprep.subr.mxu0 0.0
  %545 = vmatpush1.msra.mxu0 0.0
  %546 = vmatprep.subr.mxu0 0.0
  %547 = vmatpush1.msra.mxu0 0.0
  %548 = vmatprep.subr.mxu0 0.0
  %549 = vmatpush1.msra.mxu0 0.0
  %550 = vmatprep.subr.mxu0 0.0
  %551 = vmatpush1.msra.mxu0 0.0
  %552 = vmatprep.subr.mxu0 0.0
  %553 = vmatpush1.msra.mxu0 0.0
  %554 = vmatprep.subr.mxu0 0.0
  %555 = vmatpush1.msra.mxu0 0.0
  %556 = vmatprep.subr.mxu0 0.0
  %557 = vmatpush1.msra.mxu0 0.0
  %558 = vmatprep.subr.mxu0 0.0
  %559 = vmatpush1.msra.mxu0 0.0
  %560 = vmatprep.subr.mxu0 0.0
  %561 = vmatpush1.msra.mxu0 0.0
  %562 = vmatprep.subr.mxu0 0.0
  %563 = vmatpush1.msra.mxu0 0.0
  %564 = vmatprep.subr.mxu0 0.0
  %565 = vmatpush1.msra.mxu0 0.0
  %566 = vmatprep.subr.mxu0 0.0
  %567 = vmatpush1.msra.mxu0 0.0
  %568 = vmatprep.subr.mxu0 0.0
  %569 = vmatpush1.msra.mxu0 0.0
  %570 = vmatprep.subr.mxu0 0.0
  %571 = vmatpush1.msra.mxu0 0.0
  %572 = vmatprep.subr.mxu0 0.0
  %573 = vmatpush1.msra.mxu0 0.0
  %574 = vmatprep.subr.mxu0 0.0
  %575 = vmatpush1.msra.mxu0 0.0
  %576 = vmatprep.subr.mxu0 0.0
  %577 = vmatpush1.msra.mxu0 0.0
  %578 = vmatprep.subr.mxu0 0.0
  %579 = vmatpush1.msra.mxu0 0.0
  %580 = vmatprep.subr.mxu0 0.0
  %581 = vmatpush1.msra.mxu0 0.0
  %582 = vmatprep.subr.mxu0 0.0
  %583 = vmatpush1.msra.mxu0 0.0
  %584 = vmatprep.subr.mxu0 0.0
  %585 = vmatpush1.msra.mxu0 0.0
  %586 = vmatprep.mubr.f32.mxu0 0.0
  %587 = vmatmul.mubr.f32.gmra.mrb[0].mxu0 %v520
  %v588 = vpop.f32.mrb[0].mxu0
  %v589 = vadd.f32 0.0, %v588
  %v590 = vpop.f32.mrb[0].mxu0
  %591 = vdwg.mxu0
  %v592 = vadd.f32 %v181, %v589
  %v593 = vxor.u32 %v592, 2147483648
  %v594 = vmul.f32 %v593, 1.442695
  %v595 = vpow.pop %v594
  %v596 = vadd.f32 %v595, 1.0
  %v597 = vrcp.pop %v596
  %v598 = vmul.f32 1.0, %v597
  %v599 = vadd.f32 %v589, %v291
  %601 = vrot.lane.b32.xlu0 %v599, 64
  %v602 = vpop.permute.xlu0 %601
  %v604 = vmul.f32 %v598, %v602
  %606 = vrot.lane.b32.xlu0 %v604, 64
  %v607 = vpop.permute.xlu0 %606
  %v609 = vadd.f32 %v181, %v607
  %v610 = vtanh.pop %v609
  %v611 = vsub.f32 1.0, %v598
  %613 = vrot.lane.b32.xlu0 %v610, 96
  %v614 = vpop.permute.xlu0 %613
  %v616 = vmul.f32 %v611, %v614
  %v617 = vmul.f32 %v598, %v516
  %v618 = vadd.f32 %v616, %v617
  %620 = vrot.lane.b32.xlu0 %v618, 96
  %v621 = vpop.permute.xlu0 %620
  %v622 = vsel %vm204, %v621, 0
  %624 = vmatprep.subr.mxu0 0.0
  %625 = vmatpush1.msra.mxu0 %v49
  %626 = vmatprep.subr.mxu0 0.0
  %627 = vmatpush1.msra.mxu0 %v50
  %628 = vmatprep.subr.mxu0 0.0
  %629 = vmatpush1.msra.mxu0 %v51
  %630 = vmatprep.subr.mxu0 0.0
  %631 = vmatpush1.msra.mxu0 %v52
  %632 = vmatprep.subr.mxu0 0.0
  %633 = vmatpush1.msra.mxu0 0.0
  %634 = vmatprep.subr.mxu0 0.0
  %635 = vmatpush1.msra.mxu0 0.0
  %636 = vmatprep.subr.mxu0 0.0
  %637 = vmatpush1.msra.mxu0 0.0
  %638 = vmatprep.subr.mxu0 0.0
  %639 = vmatpush1.msra.mxu0 0.0
  %640 = vmatprep.subr.mxu0 0.0
  %641 = vmatpush1.msra.mxu0 0.0
  %642 = vmatprep.subr.mxu0 0.0
  %643 = vmatpush1.msra.mxu0 0.0
  %644 = vmatprep.subr.mxu0 0.0
  %645 = vmatpush1.msra.mxu0 0.0
  %646 = vmatprep.subr.mxu0 0.0
  %647 = vmatpush1.msra.mxu0 0.0
  %648 = vmatprep.subr.mxu0 0.0
  %649 = vmatpush1.msra.mxu0 0.0
  %650 = vmatprep.subr.mxu0 0.0
  %651 = vmatpush1.msra.mxu0 0.0
  %652 = vmatprep.subr.mxu0 0.0
  %653 = vmatpush1.msra.mxu0 0.0
  %654 = vmatprep.subr.mxu0 0.0
  %655 = vmatpush1.msra.mxu0 0.0
  %656 = vmatprep.subr.mxu0 0.0
  %657 = vmatpush1.msra.mxu0 0.0
  %658 = vmatprep.subr.mxu0 0.0
  %659 = vmatpush1.msra.mxu0 0.0
  %660 = vmatprep.subr.mxu0 0.0
  %661 = vmatpush1.msra.mxu0 0.0
  %662 = vmatprep.subr.mxu0 0.0
  %663 = vmatpush1.msra.mxu0 0.0
  %664 = vmatprep.subr.mxu0 0.0
  %665 = vmatpush1.msra.mxu0 0.0
  %666 = vmatprep.subr.mxu0 0.0
  %667 = vmatpush1.msra.mxu0 0.0
  %668 = vmatprep.subr.mxu0 0.0
  %669 = vmatpush1.msra.mxu0 0.0
  %670 = vmatprep.subr.mxu0 0.0
  %671 = vmatpush1.msra.mxu0 0.0
  %672 = vmatprep.subr.mxu0 0.0
  %673 = vmatpush1.msra.mxu0 0.0
  %674 = vmatprep.subr.mxu0 0.0
  %675 = vmatpush1.msra.mxu0 0.0
  %676 = vmatprep.subr.mxu0 0.0
  %677 = vmatpush1.msra.mxu0 0.0
  %678 = vmatprep.subr.mxu0 0.0
  %679 = vmatpush1.msra.mxu0 0.0
  %680 = vmatprep.subr.mxu0 0.0
  %681 = vmatpush1.msra.mxu0 0.0
  %682 = vmatprep.subr.mxu0 0.0
  %683 = vmatpush1.msra.mxu0 0.0
  %684 = vmatprep.subr.mxu0 0.0
  %685 = vmatpush1.msra.mxu0 0.0
  %686 = vmatprep.subr.mxu0 0.0
  %687 = vmatpush1.msra.mxu0 0.0
  %688 = vmatprep.mubr.f32.mxu0 0.0
  %689 = vmatmul.mubr.f32.gmra.mrb[0].mxu0 %v622
  %v690 = vpop.f32.mrb[0].mxu0
  %v691 = vadd.f32 0.0, %v690
  %v692 = vpop.f32.mrb[0].mxu0
  %693 = vdwg.mxu0
  %v694 = vadd.f32 %v186, %v691
  %v695 = vxor.u32 %v694, 2147483648
  %v696 = vmul.f32 %v695, 1.442695
  %v697 = vpow.pop %v696
  %v698 = vadd.f32 %v697, 1.0
  %v699 = vrcp.pop %v698
  %v700 = vmul.f32 1.0, %v699
  %v701 = vadd.f32 %v691, %v291
  %703 = vrot.lane.b32.xlu0 %v701, 64
  %v704 = vpop.permute.xlu0 %703
  %v706 = vmul.f32 %v700, %v704
  %708 = vrot.lane.b32.xlu0 %v706, 64
  %v709 = vpop.permute.xlu0 %708
  %v711 = vadd.f32 %v186, %v709
  %v712 = vtanh.pop %v711
  %v713 = vsub.f32 1.0, %v700
  %715 = vrot.lane.b32.xlu0 %v712, 96
  %v716 = vpop.permute.xlu0 %715
  %v718 = vmul.f32 %v713, %v716
  %v719 = vmul.f32 %v700, %v618
  %v720 = vadd.f32 %v718, %v719
  %722 = vrot.lane.b32.xlu0 %v720, 96
  %v723 = vpop.permute.xlu0 %722
  %v724 = vsel %vm204, %v723, 0
  %726 = vmatprep.subr.mxu0 0.0
  %727 = vmatpush1.msra.mxu0 %v49
  %728 = vmatprep.subr.mxu0 0.0
  %729 = vmatpush1.msra.mxu0 %v50
  %730 = vmatprep.subr.mxu0 0.0
  %731 = vmatpush1.msra.mxu0 %v51
  %732 = vmatprep.subr.mxu0 0.0
  %733 = vmatpush1.msra.mxu0 %v52
  %734 = vmatprep.subr.mxu0 0.0
  %735 = vmatpush1.msra.mxu0 0.0
  %736 = vmatprep.subr.mxu0 0.0
  %737 = vmatpush1.msra.mxu0 0.0
  %738 = vmatprep.subr.mxu0 0.0
  %739 = vmatpush1.msra.mxu0 0.0
  %740 = vmatprep.subr.mxu0 0.0
  %741 = vmatpush1.msra.mxu0 0.0
  %742 = vmatprep.subr.mxu0 0.0
  %743 = vmatpush1.msra.mxu0 0.0
  %744 = vmatprep.subr.mxu0 0.0
  %745 = vmatpush1.msra.mxu0 0.0
  %746 = vmatprep.subr.mxu0 0.0
  %747 = vmatpush1.msra.mxu0 0.0
  %748 = vmatprep.subr.mxu0 0.0
  %749 = vmatpush1.msra.mxu0 0.0
  %750 = vmatprep.subr.mxu0 0.0
  %751 = vmatpush1.msra.mxu0 0.0
  %752 = vmatprep.subr.mxu0 0.0
  %753 = vmatpush1.msra.mxu0 0.0
  %754 = vmatprep.subr.mxu0 0.0
  %755 = vmatpush1.msra.mxu0 0.0
  %756 = vmatprep.subr.mxu0 0.0
  %757 = vmatpush1.msra.mxu0 0.0
  %758 = vmatprep.subr.mxu0 0.0
  %759 = vmatpush1.msra.mxu0 0.0
  %760 = vmatprep.subr.mxu0 0.0
  %761 = vmatpush1.msra.mxu0 0.0
  %762 = vmatprep.subr.mxu0 0.0
  %763 = vmatpush1.msra.mxu0 0.0
  %764 = vmatprep.subr.mxu0 0.0
  %765 = vmatpush1.msra.mxu0 0.0
  %766 = vmatprep.subr.mxu0 0.0
  %767 = vmatpush1.msra.mxu0 0.0
  %768 = vmatprep.subr.mxu0 0.0
  %769 = vmatpush1.msra.mxu0 0.0
  %770 = vmatprep.subr.mxu0 0.0
  %771 = vmatpush1.msra.mxu0 0.0
  %772 = vmatprep.subr.mxu0 0.0
  %773 = vmatpush1.msra.mxu0 0.0
  %774 = vmatprep.subr.mxu0 0.0
  %775 = vmatpush1.msra.mxu0 0.0
  %776 = vmatprep.subr.mxu0 0.0
  %777 = vmatpush1.msra.mxu0 0.0
  %778 = vmatprep.subr.mxu0 0.0
  %779 = vmatpush1.msra.mxu0 0.0
  %780 = vmatprep.subr.mxu0 0.0
  %781 = vmatpush1.msra.mxu0 0.0
  %782 = vmatprep.subr.mxu0 0.0
  %783 = vmatpush1.msra.mxu0 0.0
  %784 = vmatprep.subr.mxu0 0.0
  %785 = vmatpush1.msra.mxu0 0.0
  %786 = vmatprep.subr.mxu0 0.0
  %787 = vmatpush1.msra.mxu0 0.0
  %788 = vmatprep.subr.mxu0 0.0
  %789 = vmatpush1.msra.mxu0 0.0
  %790 = vmatprep.mubr.f32.mxu0 0.0
  %791 = vmatmul.mubr.f32.gmra.mrb[0].mxu0 %v724
  %v792 = vpop.f32.mrb[0].mxu0
  %v793 = vadd.f32 0.0, %v792
  %v794 = vpop.f32.mrb[0].mxu0
  %795 = vdwg.mxu0
  %v796 = vadd.f32 %v191, %v793
  %v797 = vxor.u32 %v796, 2147483648
  %v798 = vmul.f32 %v797, 1.442695
  %v799 = vpow.pop %v798
  %v800 = vadd.f32 %v799, 1.0
  %v801 = vrcp.pop %v800
  %v802 = vmul.f32 1.0, %v801
  %v803 = vadd.f32 %v793, %v291
  %805 = vrot.lane.b32.xlu0 %v803, 64
  %v806 = vpop.permute.xlu0 %805
  %v808 = vmul.f32 %v802, %v806
  %810 = vrot.lane.b32.xlu0 %v808, 64
  %v811 = vpop.permute.xlu0 %810
  %v813 = vadd.f32 %v191, %v811
  %v814 = vtanh.pop %v813
  %v815 = vsub.f32 1.0, %v802
  %817 = vrot.lane.b32.xlu0 %v814, 96
  %v818 = vpop.permute.xlu0 %817
  %v820 = vmul.f32 %v815, %v818
  %v821 = vmul.f32 %v802, %v720
  %v822 = vadd.f32 %v820, %v821
  %824 = vrot.lane.b32.xlu0 %v822, 96
  %v825 = vpop.permute.xlu0 %824
  %v826 = vsel %vm204, %v825, 0
  %828 = vmatprep.subr.mxu0 0.0
  %829 = vmatpush1.msra.mxu0 %v49
  %830 = vmatprep.subr.mxu0 0.0
  %831 = vmatpush1.msra.mxu0 %v50
  %832 = vmatprep.subr.mxu0 0.0
  %833 = vmatpush1.msra.mxu0 %v51
  %834 = vmatprep.subr.mxu0 0.0
  %835 = vmatpush1.msra.mxu0 %v52
  %836 = vmatprep.subr.mxu0 0.0
  %837 = vmatpush1.msra.mxu0 0.0
  %838 = vmatprep.subr.mxu0 0.0
  %839 = vmatpush1.msra.mxu0 0.0
  %840 = vmatprep.subr.mxu0 0.0
  %841 = vmatpush1.msra.mxu0 0.0
  %842 = vmatprep.subr.mxu0 0.0
  %843 = vmatpush1.msra.mxu0 0.0
  %844 = vmatprep.subr.mxu0 0.0
  %845 = vmatpush1.msra.mxu0 0.0
  %846 = vmatprep.subr.mxu0 0.0
  %847 = vmatpush1.msra.mxu0 0.0
  %848 = vmatprep.subr.mxu0 0.0
  %849 = vmatpush1.msra.mxu0 0.0
  %850 = vmatprep.subr.mxu0 0.0
  %851 = vmatpush1.msra.mxu0 0.0
  %852 = vmatprep.subr.mxu0 0.0
  %853 = vmatpush1.msra.mxu0 0.0
  %854 = vmatprep.subr.mxu0 0.0
  %855 = vmatpush1.msra.mxu0 0.0
  %856 = vmatprep.subr.mxu0 0.0
  %857 = vmatpush1.msra.mxu0 0.0
  %858 = vmatprep.subr.mxu0 0.0
  %859 = vmatpush1.msra.mxu0 0.0
  %860 = vmatprep.subr.mxu0 0.0
  %861 = vmatpush1.msra.mxu0 0.0
  %862 = vmatprep.subr.mxu0 0.0
  %863 = vmatpush1.msra.mxu0 0.0
  %864 = vmatprep.subr.mxu0 0.0
  %865 = vmatpush1.msra.mxu0 0.0
  %866 = vmatprep.subr.mxu0 0.0
  %867 = vmatpush1.msra.mxu0 0.0
  %868 = vmatprep.subr.mxu0 0.0
  %869 = vmatpush1.msra.mxu0 0.0
  %870 = vmatprep.subr.mxu0 0.0
  %871 = vmatpush1.msra.mxu0 0.0
  %872 = vmatprep.subr.mxu0 0.0
  %873 = vmatpush1.msra.mxu0 0.0
  %874 = vmatprep.subr.mxu0 0.0
  %875 = vmatpush1.msra.mxu0 0.0
  %876 = vmatprep.subr.mxu0 0.0
  %877 = vmatpush1.msra.mxu0 0.0
  %878 = vmatprep.subr.mxu0 0.0
  %879 = vmatpush1.msra.mxu0 0.0
  %880 = vmatprep.subr.mxu0 0.0
  %881 = vmatpush1.msra.mxu0 0.0
  %882 = vmatprep.subr.mxu0 0.0
  %883 = vmatpush1.msra.mxu0 0.0
  %884 = vmatprep.subr.mxu0 0.0
  %885 = vmatpush1.msra.mxu0 0.0
  %886 = vmatprep.subr.mxu0 0.0
  %887 = vmatpush1.msra.mxu0 0.0
  %888 = vmatprep.subr.mxu0 0.0
  %889 = vmatpush1.msra.mxu0 0.0
  %890 = vmatprep.subr.mxu0 0.0
  %891 = vmatpush1.msra.mxu0 0.0
  %892 = vmatprep.mubr.f32.mxu0 0.0
  %893 = vmatmul.mubr.f32.gmra.mrb[0].mxu0 %v826
  %v894 = vpop.f32.mrb[0].mxu0
  %v895 = vadd.f32 0.0, %v894
  %v896 = vpop.f32.mrb[0].mxu0
  %897 = vdwg.mxu0
  %v898 = vadd.f32 %v196, %v895
  %v899 = vxor.u32 %v898, 2147483648
  %v900 = vmul.f32 %v899, 1.442695
  %v901 = vpow.pop %v900
  %v902 = vadd.f32 %v901, 1.0
  %v903 = vrcp.pop %v902
  %v904 = vmul.f32 1.0, %v903
  %v905 = vadd.f32 %v895, %v291
  %907 = vrot.lane.b32.xlu0 %v905, 64
  %v908 = vpop.permute.xlu0 %907
  %v910 = vmul.f32 %v904, %v908
  %912 = vrot.lane.b32.xlu0 %v910, 64
  %v913 = vpop.permute.xlu0 %912
  %v915 = vadd.f32 %v196, %v913
  %v916 = vtanh.pop %v915
  %v917 = vsub.f32 1.0, %v904
  %919 = vrot.lane.b32.xlu0 %v916, 96
  %v920 = vpop.permute.xlu0 %919
  %v922 = vmul.f32 %v917, %v920
  %v923 = vmul.f32 %v904, %v822
  %v924 = vadd.f32 %v922, %v923
  %926 = vrot.lane.b32.xlu0 %v924, 96
  %v927 = vpop.permute.xlu0 %926
  %v928 = vsel %vm204, %v927, 0
  %930 = vmatprep.subr.mxu0 0.0
  %931 = vmatpush1.msra.mxu0 %v49
  %932 = vmatprep.subr.mxu0 0.0
  %933 = vmatpush1.msra.mxu0 %v50
  %934 = vmatprep.subr.mxu0 0.0
  %935 = vmatpush1.msra.mxu0 %v51
  %936 = vmatprep.subr.mxu0 0.0
  %937 = vmatpush1.msra.mxu0 %v52
  %938 = vmatprep.subr.mxu0 0.0
  %939 = vmatpush1.msra.mxu0 0.0
  %940 = vmatprep.subr.mxu0 0.0
  %941 = vmatpush1.msra.mxu0 0.0
  %942 = vmatprep.subr.mxu0 0.0
  %943 = vmatpush1.msra.mxu0 0.0
  %944 = vmatprep.subr.mxu0 0.0
  %945 = vmatpush1.msra.mxu0 0.0
  %946 = vmatprep.subr.mxu0 0.0
  %947 = vmatpush1.msra.mxu0 0.0
  %948 = vmatprep.subr.mxu0 0.0
  %949 = vmatpush1.msra.mxu0 0.0
  %950 = vmatprep.subr.mxu0 0.0
  %951 = vmatpush1.msra.mxu0 0.0
  %952 = vmatprep.subr.mxu0 0.0
  %953 = vmatpush1.msra.mxu0 0.0
  %954 = vmatprep.subr.mxu0 0.0
  %955 = vmatpush1.msra.mxu0 0.0
  %956 = vmatprep.subr.mxu0 0.0
  %957 = vmatpush1.msra.mxu0 0.0
  %958 = vmatprep.subr.mxu0 0.0
  %959 = vmatpush1.msra.mxu0 0.0
  %960 = vmatprep.subr.mxu0 0.0
  %961 = vmatpush1.msra.mxu0 0.0
  %962 = vmatprep.subr.mxu0 0.0
  %963 = vmatpush1.msra.mxu0 0.0
  %964 = vmatprep.subr.mxu0 0.0
  %965 = vmatpush1.msra.mxu0 0.0
  %966 = vmatprep.subr.mxu0 0.0
  %967 = vmatpush1.msra.mxu0 0.0
  %968 = vmatprep.subr.mxu0 0.0
  %969 = vmatpush1.msra.mxu0 0.0
  %970 = vmatprep.subr.mxu0 0.0
  %971 = vmatpush1.msra.mxu0 0.0
  %972 = vmatprep.subr.mxu0 0.0
  %973 = vmatpush1.msra.mxu0 0.0
  %974 = vmatprep.subr.mxu0 0.0
  %975 = vmatpush1.msra.mxu0 0.0
  %976 = vmatprep.subr.mxu0 0.0
  %977 = vmatpush1.msra.mxu0 0.0
  %978 = vmatprep.subr.mxu0 0.0
  %979 = vmatpush1.msra.mxu0 0.0
  %980 = vmatprep.subr.mxu0 0.0
  %981 = vmatpush1.msra.mxu0 0.0
  %982 = vmatprep.subr.mxu0 0.0
  %983 = vmatpush1.msra.mxu0 0.0
  %984 = vmatprep.subr.mxu0 0.0
  %985 = vmatpush1.msra.mxu0 0.0
  %986 = vmatprep.subr.mxu0 0.0
  %987 = vmatpush1.msra.mxu0 0.0
  %988 = vmatprep.subr.mxu0 0.0
  %989 = vmatpush1.msra.mxu0 0.0
  %990 = vmatprep.subr.mxu0 0.0
  %991 = vmatpush1.msra.mxu0 0.0
  %992 = vmatprep.subr.mxu0 0.0
  %993 = vmatpush1.msra.mxu0 0.0
  %994 = vmatprep.mubr.f32.mxu0 0.0
  %995 = vmatmul.mubr.f32.gmra.mrb[0].mxu0 %v928
  %v996 = vpop.f32.mrb[0].mxu0
  %v997 = vadd.f32 0.0, %v996
  %v998 = vpop.f32.mrb[0].mxu0
  %999 = vdwg.mxu0
  %v1000 = vadd.f32 %v201, %v997
  %v1001 = vxor.u32 %v1000, 2147483648
  %v1002 = vmul.f32 %v1001, 1.442695
  %v1003 = vpow.pop %v1002
  %v1004 = vadd.f32 %v1003, 1.0
  %v1005 = vrcp.pop %v1004
  %v1006 = vmul.f32 1.0, %v1005
  %v1007 = vadd.f32 %v997, %v291
  %1009 = vrot.lane.b32.xlu0 %v1007, 64
  %v1010 = vpop.permute.xlu0 %1009
  %v1012 = vmul.f32 %v1006, %v1010
  %1014 = vrot.lane.b32.xlu0 %v1012, 64
  %v1015 = vpop.permute.xlu0 %1014
  %v1017 = vadd.f32 %v201, %v1015
  %v1018 = vtanh.pop %v1017
  %v1019 = vsub.f32 1.0, %v1006
  %1021 = vrot.lane.b32.xlu0 %v1018, 96
  %v1022 = vpop.permute.xlu0 %1021
  %v1024 = vmul.f32 %v1019, %v1022
  %v1025 = vmul.f32 %v1006, %v924
  %v1026 = vadd.f32 %v1024, %v1025
  %v1027 = vld [vmem:[%s7] sm:$0x1]
  %v1028 = vld [vmem:[%s9] sm:$0xff]
  %v1029 = vld [vmem:[%s9 + $0x8] sm:$0xff]
  %v1030 = vld [vmem:[%s9 + $0x10] sm:$0xff]
  %v1031 = vld [vmem:[%s9 + $0x18] sm:$0xff]
  %v1032 = vld [vmem:[%s11] sm:$0x1]
  %v1033 = vld [vmem:[%s12] sm:$0xff]
  %v1034 = vld [vmem:[%s12 + $0x8] sm:$0xff]
  %v1035 = vld [vmem:[%s12 + $0x10] sm:$0xff]
  %v1036 = vld [vmem:[%s12 + $0x18] sm:$0xff]
  %v1037 = vld [vmem:[#allocation2] sm:$0x1]
  %v1038 = vld [vmem:[%s1] sm:$0xff]
  %v1039 = vld [vmem:[%s1 + $0x8] sm:$0xff]
  %v1040 = vld [vmem:[%s1 + $0x10] sm:$0xff]
  %v1041 = vld [vmem:[%s8] sm:$0xf]
  %v1042 = vld [vmem:[%s10] sm:$0x1]
  %v1044 = vlaneseq
  %v1045 = vshrl.u32 %v1044, 7
  %v1046 = vsub.s32 0, %v1045
  %v1047 = vrot.slane %v1042, %v1046
  %v1050 = vsel %vm70, %v1038, 0
  %v1053 = vsel %vm70, %v1039, 0
  %v1056 = vsel %vm70, %v1040, 0
  %v1059 = vsel %vm95, %v1041, 0
  %1061 = vmatprep.subr.mxu0 0.0
  %1062 = vmatpush1.msra.mxu0 %v1059
  %1063 = vmatprep.subr.mxu0 0.0
  %1064 = vmatpush1.msra.mxu0 0.0
  %1065 = vmatprep.subr.mxu0 0.0
  %1066 = vmatpush1.msra.mxu0 0.0
  %1067 = vmatprep.subr.mxu0 0.0
  %1068 = vmatpush1.msra.mxu0 0.0
  %1069 = vmatprep.subr.mxu0 0.0
  %1070 = vmatpush1.msra.mxu0 0.0
  %1071 = vmatprep.subr.mxu0 0.0
  %1072 = vmatpush1.msra.mxu0 0.0
  %1073 = vmatprep.subr.mxu0 0.0
  %1074 = vmatpush1.msra.mxu0 0.0
  %1075 = vmatprep.subr.mxu0 0.0
  %1076 = vmatpush1.msra.mxu0 0.0
  %1077 = vmatprep.subr.mxu0 0.0
  %1078 = vmatpush1.msra.mxu0 0.0
  %1079 = vmatprep.subr.mxu0 0.0
  %1080 = vmatpush1.msra.mxu0 0.0
  %1081 = vmatprep.subr.mxu0 0.0
  %1082 = vmatpush1.msra.mxu0 0.0
  %1083 = vmatprep.subr.mxu0 0.0
  %1084 = vmatpush1.msra.mxu0 0.0
  %1085 = vmatprep.subr.mxu0 0.0
  %1086 = vmatpush1.msra.mxu0 0.0
  %1087 = vmatprep.subr.mxu0 0.0
  %1088 = vmatpush1.msra.mxu0 0.0
  %1089 = vmatprep.subr.mxu0 0.0
  %1090 = vmatpush1.msra.mxu0 0.0
  %1091 = vmatprep.subr.mxu0 0.0
  %1092 = vmatpush1.msra.mxu0 0.0
  %1093 = vmatprep.subr.mxu0 0.0
  %1094 = vmatpush1.msra.mxu0 0.0
  %1095 = vmatprep.subr.mxu0 0.0
  %1096 = vmatpush1.msra.mxu0 0.0
  %1097 = vmatprep.subr.mxu0 0.0
  %1098 = vmatpush1.msra.mxu0 0.0
  %1099 = vmatprep.subr.mxu0 0.0
  %1100 = vmatpush1.msra.mxu0 0.0
  %1101 = vmatprep.subr.mxu0 0.0
  %1102 = vmatpush1.msra.mxu0 0.0
  %1103 = vmatprep.subr.mxu0 0.0
  %1104 = vmatpush1.msra.mxu0 0.0
  %1105 = vmatprep.subr.mxu0 0.0
  %1106 = vmatpush1.msra.mxu0 0.0
  %1107 = vmatprep.subr.mxu0 0.0
  %1108 = vmatpush1.msra.mxu0 0.0
  %1109 = vmatprep.subr.mxu0 0.0
  %1110 = vmatpush1.msra.mxu0 0.0
  %1111 = vmatprep.subr.mxu0 0.0
  %1112 = vmatpush1.msra.mxu0 0.0
  %1113 = vmatprep.subr.mxu0 0.0
  %1114 = vmatpush1.msra.mxu0 0.0
  %1115 = vmatprep.subr.mxu0 0.0
  %1116 = vmatpush1.msra.mxu0 0.0
  %1117 = vmatprep.subr.mxu0 0.0
  %1118 = vmatpush1.msra.mxu0 0.0
  %1119 = vmatprep.subr.mxu0 0.0
  %1120 = vmatpush1.msra.mxu0 0.0
  %1121 = vmatprep.subr.mxu0 0.0
  %1122 = vmatpush1.msra.mxu0 0.0
  %1123 = vmatprep.subr.mxu0 0.0
  %1124 = vmatpush1.msra.mxu0 0.0
  %1125 = vmatprep.mubr.f32.mxu0 0.0
  %1126 = vmatmul.mubr.f32.gmra.mrb[0].mxu0 %v1050
  %v1127 = vpop.f32.mrb[0].mxu0
  %v1128 = vadd.f32 %v1047, %v1127
  %v1129 = vpop.f32.mrb[0].mxu0
  %1130 = vmatprep.mubr.f32.mxu0 0.0
  %1131 = vmatmul.mubr.f32.gmra.mrb[0].mxu0 %v1053
  %v1132 = vpop.f32.mrb[0].mxu0
  %v1133 = vadd.f32 %v1047, %v1132
  %v1134 = vpop.f32.mrb[0].mxu0
  %1135 = vmatprep.mubr.f32.mxu0 0.0
  %1136 = vmatmul.mubr.f32.gmra.mrb[0].mxu0 %v1056
  %v1137 = vpop.f32.mrb[0].mxu0
  %v1138 = vadd.f32 %v1047, %v1137
  %v1139 = vpop.f32.mrb[0].mxu0
  %1140 = vdwg.mxu0
  %v1141 = vld [vmem:[%s2] sm:$0xff]
  %1143 = vset.pattern.permute.xlu0 0
  %1144 = vperm.xlu0 %1143, %v1141
  %v1145 = vpop.permute.xlu0 %1144
  %v1148 = vlaneseq
  %v1149 = vshrl.u32 %v1148, 7
  %v1150 = vsub.s32 0, %v1149
  %v1151 = vrot.slane %v1027, %v1150
  %v1153 = vmul.f32 %v1145, %v1151
  %v1154 = vadd.f32 %v1128, %v1153
  %1156 = vrot.lane.b32.xlu0 %v1026, 96
  %v1157 = vpop.permute.xlu0 %1156
  %v1158 = vsel %vm204, %v1157, 0
  %1160 = vmatprep.subr.mxu0 0.0
  %1161 = vmatpush1.msra.mxu0 %v1028
  %1162 = vmatprep.subr.mxu0 0.0
  %1163 = vmatpush1.msra.mxu0 %v1029
  %1164 = vmatprep.subr.mxu0 0.0
  %1165 = vmatpush1.msra.mxu0 %v1030
  %1166 = vmatprep.subr.mxu0 0.0
  %1167 = vmatpush1.msra.mxu0 %v1031
  %1168 = vmatprep.subr.mxu0 0.0
  %1169 = vmatpush1.msra.mxu0 0.0
  %1170 = vmatprep.subr.mxu0 0.0
  %1171 = vmatpush1.msra.mxu0 0.0
  %1172 = vmatprep.subr.mxu0 0.0
  %1173 = vmatpush1.msra.mxu0 0.0
  %1174 = vmatprep.subr.mxu0 0.0
  %1175 = vmatpush1.msra.mxu0 0.0
  %1176 = vmatprep.subr.mxu0 0.0
  %1177 = vmatpush1.msra.mxu0 0.0
  %1178 = vmatprep.subr.mxu0 0.0
  %1179 = vmatpush1.msra.mxu0 0.0
  %1180 = vmatprep.subr.mxu0 0.0
  %1181 = vmatpush1.msra.mxu0 0.0
  %1182 = vmatprep.subr.mxu0 0.0
  %1183 = vmatpush1.msra.mxu0 0.0
  %1184 = vmatprep.subr.mxu0 0.0
  %1185 = vmatpush1.msra.mxu0 0.0
  %1186 = vmatprep.subr.mxu0 0.0
  %1187 = vmatpush1.msra.mxu0 0.0
  %1188 = vmatprep.subr.mxu0 0.0
  %1189 = vmatpush1.msra.mxu0 0.0
  %1190 = vmatprep.subr.mxu0 0.0
  %1191 = vmatpush1.msra.mxu0 0.0
  %1192 = vmatprep.subr.mxu0 0.0
  %1193 = vmatpush1.msra.mxu0 0.0
  %1194 = vmatprep.subr.mxu0 0.0
  %1195 = vmatpush1.msra.mxu0 0.0
  %1196 = vmatprep.subr.mxu0 0.0
  %1197 = vmatpush1.msra.mxu0 0.0
  %1198 = vmatprep.subr.mxu0 0.0
  %1199 = vmatpush1.msra.mxu0 0.0
  %1200 = vmatprep.subr.mxu0 0.0
  %1201 = vmatpush1.msra.mxu0 0.0
  %1202 = vmatprep.subr.mxu0 0.0
  %1203 = vmatpush1.msra.mxu0 0.0
  %1204 = vmatprep.subr.mxu0 0.0
  %1205 = vmatpush1.msra.mxu0 0.0
  %1206 = vmatprep.subr.mxu0 0.0
  %1207 = vmatpush1.msra.mxu0 0.0
  %1208 = vmatprep.subr.mxu0 0.0
  %1209 = vmatpush1.msra.mxu0 0.0
  %1210 = vmatprep.subr.mxu0 0.0
  %1211 = vmatpush1.msra.mxu0 0.0
  %1212 = vmatprep.subr.mxu0 0.0
  %1213 = vmatpush1.msra.mxu0 0.0
  %1214 = vmatprep.subr.mxu0 0.0
  %1215 = vmatpush1.msra.mxu0 0.0
  %1216 = vmatprep.subr.mxu0 0.0
  %1217 = vmatpush1.msra.mxu0 0.0
  %1218 = vmatprep.subr.mxu0 0.0
  %1219 = vmatpush1.msra.mxu0 0.0
  %1220 = vmatprep.subr.mxu0 0.0
  %1221 = vmatpush1.msra.mxu0 0.0
  %1222 = vmatprep.subr.mxu0 0.0
  %1223 = vmatpush1.msra.mxu0 0.0
  %1224 = vmatprep.mubr.f32.mxu0 0.0
  %1225 = vmatmul.mubr.f32.gmra.mrb[0].mxu0 %v1158
  %v1226 = vpop.f32.mrb[0].mxu0
  %v1227 = vadd.f32 0.0, %v1226
  %v1228 = vpop.f32.mrb[0].mxu0
  %1229 = vdwg.mxu0
  %v1230 = vadd.f32 %v1154, %v1227
  %v1231 = vxor.u32 %v1230, 2147483648
  %v1232 = vmul.f32 %v1231, 1.442695
  %v1233 = vpow.pop %v1232
  %v1234 = vadd.f32 %v1233, 1.0
  %v1235 = vrcp.pop %v1234
  %v1236 = vmul.f32 1.0, %v1235
  %v1238 = vlaneseq
  %v1239 = vshrl.u32 %v1238, 7
  %v1240 = vsub.s32 0, %v1239
  %v1241 = vrot.slane %v1032, %v1240
  %1242 = vrot.lane.b32.xlu0 %v1241, 64
  %v1243 = vpop.permute.xlu0 %1242
  %v1245 = vadd.f32 %v1227, %v1243
  %1247 = vrot.lane.b32.xlu0 %v1245, 64
  %v1248 = vpop.permute.xlu0 %1247
  %v1250 = vmul.f32 %v1236, %v1248
  %1252 = vrot.lane.b32.xlu0 %v1250, 64
  %v1253 = vpop.permute.xlu0 %1252
  %v1255 = vadd.f32 %v1154, %v1253
  %v1256 = vtanh.pop %v1255
  %v1257 = vsub.f32 1.0, %v1236
  %1259 = vrot.lane.b32.xlu0 %v1256, 96
  %v1260 = vpop.permute.xlu0 %1259
  %v1262 = vmul.f32 %v1257, %v1260
  %v1263 = vmul.f32 %v1236, %v1026
  %v1264 = vadd.f32 %v1262, %v1263
  %v1266 = vlaneseq
  %v1267 = vshrl.u32 %v1266, 7
  %v1268 = vsub.s32 0, %v1267
  %v1269 = vrot.slane %v1037, %v1268
  %1272 = vrot.lane.b32.xlu0 %v1264, 96
  %v1273 = vpop.permute.xlu0 %1272
  %v1274 = vsel %vm204, %v1273, 0
  %1276 = vmatprep.subr.mxu0 0.0
  %1277 = vmatpush1.msra.mxu0 %v1033
  %1278 = vmatprep.subr.mxu0 0.0
  %1279 = vmatpush1.msra.mxu0 %v1034
  %1280 = vmatprep.subr.mxu0 0.0
  %1281 = vmatpush1.msra.mxu0 %v1035
  %1282 = vmatprep.subr.mxu0 0.0
  %1283 = vmatpush1.msra.mxu0 %v1036
  %1284 = vmatprep.subr.mxu0 0.0
  %1285 = vmatpush1.msra.mxu0 0.0
  %1286 = vmatprep.subr.mxu0 0.0
  %1287 = vmatpush1.msra.mxu0 0.0
  %1288 = vmatprep.subr.mxu0 0.0
  %1289 = vmatpush1.msra.mxu0 0.0
  %1290 = vmatprep.subr.mxu0 0.0
  %1291 = vmatpush1.msra.mxu0 0.0
  %1292 = vmatprep.subr.mxu0 0.0
  %1293 = vmatpush1.msra.mxu0 0.0
  %1294 = vmatprep.subr.mxu0 0.0
  %1295 = vmatpush1.msra.mxu0 0.0
  %1296 = vmatprep.subr.mxu0 0.0
  %1297 = vmatpush1.msra.mxu0 0.0
  %1298 = vmatprep.subr.mxu0 0.0
  %1299 = vmatpush1.msra.mxu0 0.0
  %1300 = vmatprep.subr.mxu0 0.0
  %1301 = vmatpush1.msra.mxu0 0.0
  %1302 = vmatprep.subr.mxu0 0.0
  %1303 = vmatpush1.msra.mxu0 0.0
  %1304 = vmatprep.subr.mxu0 0.0
  %1305 = vmatpush1.msra.mxu0 0.0
  %1306 = vmatprep.subr.mxu0 0.0
  %1307 = vmatpush1.msra.mxu0 0.0
  %1308 = vmatprep.subr.mxu0 0.0
  %1309 = vmatpush1.msra.mxu0 0.0
  %1310 = vmatprep.subr.mxu0 0.0
  %1311 = vmatpush1.msra.mxu0 0.0
  %1312 = vmatprep.subr.mxu0 0.0
  %1313 = vmatpush1.msra.mxu0 0.0
  %1314 = vmatprep.subr.mxu0 0.0
  %1315 = vmatpush1.msra.mxu0 0.0
  %1316 = vmatprep.subr.mxu0 0.0
  %1317 = vmatpush1.msra.mxu0 0.0
  %1318 = vmatprep.subr.mxu0 0.0
  %1319 = vmatpush1.msra.mxu0 0.0
  %1320 = vmatprep.subr.mxu0 0.0
  %1321 = vmatpush1.msra.mxu0 0.0
  %1322 = vmatprep.subr.mxu0 0.0
  %1323 = vmatpush1.msra.mxu0 0.0
  %1324 = vmatprep.subr.mxu0 0.0
  %1325 = vmatpush1.msra.mxu0 0.0
  %1326 = vmatprep.subr.mxu0 0.0
  %1327 = vmatpush1.msra.mxu0 0.0
  %1328 = vmatprep.subr.mxu0 0.0
  %1329 = vmatpush1.msra.mxu0 0.0
  %1330 = vmatprep.subr.mxu0 0.0
  %1331 = vmatpush1.msra.mxu0 0.0
  %1332 = vmatprep.subr.mxu0 0.0
  %1333 = vmatpush1.msra.mxu0 0.0
  %1334 = vmatprep.subr.mxu0 0.0
  %1335 = vmatpush1.msra.mxu0 0.0
  %1336 = vmatprep.subr.mxu0 0.0
  %1337 = vmatpush1.msra.mxu0 0.0
  %1338 = vmatprep.subr.mxu0 0.0
  %1339 = vmatpush1.msra.mxu0 0.0
  %1340 = vmatprep.mubr.f32.mxu0 0.0
  %1341 = vmatmul.mubr.f32.gmra.mrb[0].mxu0 %v1274
  %v1342 = vpop.f32.mrb[0].mxu0
  %v1343 = vadd.f32 %v1269, %v1342
  %v1344 = vpop.f32.mrb[0].mxu0
  %1345 = vdwg.mxu0
  %vm1346 = vcmask 7168
  %1347 = vst.msk [vmem:[%s14] sm:$0xff] %vm1346, %v1343
  %1349 = vset.pattern.permute.xlu0 0
  %1350 = vperm.xlu0 %1349, %v1343
  %v1351 = vpop.permute.xlu0 %1350
  %v1353 = vmul.f32 %v1351, %v1151
  %v1354 = vadd.f32 %v1133, %v1353
  %1355 = vmatprep.subr.mxu0 0.0
  %1356 = vmatpush1.msra.mxu0 %v1028
  %1357 = vmatprep.subr.mxu0 0.0
  %1358 = vmatpush1.msra.mxu0 %v1029
  %1359 = vmatprep.subr.mxu0 0.0
  %1360 = vmatpush1.msra.mxu0 %v1030
  %1361 = vmatprep.subr.mxu0 0.0
  %1362 = vmatpush1.msra.mxu0 %v1031
  %1363 = vmatprep.subr.mxu0 0.0
  %1364 = vmatpush1.msra.mxu0 0.0
  %1365 = vmatprep.subr.mxu0 0.0
  %1366 = vmatpush1.msra.mxu0 0.0
  %1367 = vmatprep.subr.mxu0 0.0
  %1368 = vmatpush1.msra.mxu0 0.0
  %1369 = vmatprep.subr.mxu0 0.0
  %1370 = vmatpush1.msra.mxu0 0.0
  %1371 = vmatprep.subr.mxu0 0.0
  %1372 = vmatpush1.msra.mxu0 0.0
  %1373 = vmatprep.subr.mxu0 0.0
  %1374 = vmatpush1.msra.mxu0 0.0
  %1375 = vmatprep.subr.mxu0 0.0
  %1376 = vmatpush1.msra.mxu0 0.0
  %1377 = vmatprep.subr.mxu0 0.0
  %1378 = vmatpush1.msra.mxu0 0.0
  %1379 = vmatprep.subr.mxu0 0.0
  %1380 = vmatpush1.msra.mxu0 0.0
  %1381 = vmatprep.subr.mxu0 0.0
  %1382 = vmatpush1.msra.mxu0 0.0
  %1383 = vmatprep.subr.mxu0 0.0
  %1384 = vmatpush1.msra.mxu0 0.0
  %1385 = vmatprep.subr.mxu0 0.0
  %1386 = vmatpush1.msra.mxu0 0.0
  %1387 = vmatprep.subr.mxu0 0.0
  %1388 = vmatpush1.msra.mxu0 0.0
  %1389 = vmatprep.subr.mxu0 0.0
  %1390 = vmatpush1.msra.mxu0 0.0
  %1391 = vmatprep.subr.mxu0 0.0
  %1392 = vmatpush1.msra.mxu0 0.0
  %1393 = vmatprep.subr.mxu0 0.0
  %1394 = vmatpush1.msra.mxu0 0.0
  %1395 = vmatprep.subr.mxu0 0.0
  %1396 = vmatpush1.msra.mxu0 0.0
  %1397 = vmatprep.subr.mxu0 0.0
  %1398 = vmatpush1.msra.mxu0 0.0
  %1399 = vmatprep.subr.mxu0 0.0
  %1400 = vmatpush1.msra.mxu0 0.0
  %1401 = vmatprep.subr.mxu0 0.0
  %1402 = vmatpush1.msra.mxu0 0.0
  %1403 = vmatprep.subr.mxu0 0.0
  %1404 = vmatpush1.msra.mxu0 0.0
  %1405 = vmatprep.subr.mxu0 0.0
  %1406 = vmatpush1.msra.mxu0 0.0
  %1407 = vmatprep.subr.mxu0 0.0
  %1408 = vmatpush1.msra.mxu0 0.0
  %1409 = vmatprep.subr.mxu0 0.0
  %1410 = vmatpush1.msra.mxu0 0.0
  %1411 = vmatprep.subr.mxu0 0.0
  %1412 = vmatpush1.msra.mxu0 0.0
  %1413 = vmatprep.subr.mxu0 0.0
  %1414 = vmatpush1.msra.mxu0 0.0
  %1415 = vmatprep.subr.mxu0 0.0
  %1416 = vmatpush1.msra.mxu0 0.0
  %1417 = vmatprep.subr.mxu0 0.0
  %1418 = vmatpush1.msra.mxu0 0.0
  %1419 = vmatprep.mubr.f32.mxu0 0.0
  %1420 = vmatmul.mubr.f32.gmra.mrb[0].mxu0 %v1274
  %v1421 = vpop.f32.mrb[0].mxu0
  %v1422 = vadd.f32 0.0, %v1421
  %v1423 = vpop.f32.mrb[0].mxu0
  %1424 = vdwg.mxu0
  %v1425 = vadd.f32 %v1354, %v1422
  %v1426 = vxor.u32 %v1425, 2147483648
  %v1427 = vmul.f32 %v1426, 1.442695
  %v1428 = vpow.pop %v1427
  %v1429 = vadd.f32 %v1428, 1.0
  %v1430 = vrcp.pop %v1429
  %v1431 = vmul.f32 1.0, %v1430
  %v1432 = vadd.f32 %v1422, %v1243
  %1434 = vrot.lane.b32.xlu0 %v1432, 64
  %v1435 = vpop.permute.xlu0 %1434
  %v1437 = vmul.f32 %v1431, %v1435
  %1439 = vrot.lane.b32.xlu0 %v1437, 64
  %v1440 = vpop.permute.xlu0 %1439
  %v1442 = vadd.f32 %v1354, %v1440
  %v1443 = vtanh.pop %v1442
  %v1444 = vsub.f32 1.0, %v1431
  %1446 = vrot.lane.b32.xlu0 %v1443, 96
  %v1447 = vpop.permute.xlu0 %1446
  %v1449 = vmul.f32 %v1444, %v1447
  %v1450 = vmul.f32 %v1431, %v1264
  %v1451 = vadd.f32 %v1449, %v1450
  %1453 = vrot.lane.b32.xlu0 %v1451, 96
  %v1454 = vpop.permute.xlu0 %1453
  %v1455 = vsel %vm204, %v1454, 0
  %1457 = vmatprep.subr.mxu0 0.0
  %1458 = vmatpush1.msra.mxu0 %v1033
  %1459 = vmatprep.subr.mxu0 0.0
  %1460 = vmatpush1.msra.mxu0 %v1034
  %1461 = vmatprep.subr.mxu0 0.0
  %1462 = vmatpush1.msra.mxu0 %v1035
  %1463 = vmatprep.subr.mxu0 0.0
  %1464 = vmatpush1.msra.mxu0 %v1036
  %1465 = vmatprep.subr.mxu0 0.0
  %1466 = vmatpush1.msra.mxu0 0.0
  %1467 = vmatprep.subr.mxu0 0.0
  %1468 = vmatpush1.msra.mxu0 0.0
  %1469 = vmatprep.subr.mxu0 0.0
  %1470 = vmatpush1.msra.mxu0 0.0
  %1471 = vmatprep.subr.mxu0 0.0
  %1472 = vmatpush1.msra.mxu0 0.0
  %1473 = vmatprep.subr.mxu0 0.0
  %1474 = vmatpush1.msra.mxu0 0.0
  %1475 = vmatprep.subr.mxu0 0.0
  %1476 = vmatpush1.msra.mxu0 0.0
  %1477 = vmatprep.subr.mxu0 0.0
  %1478 = vmatpush1.msra.mxu0 0.0
  %1479 = vmatprep.subr.mxu0 0.0
  %1480 = vmatpush1.msra.mxu0 0.0
  %1481 = vmatprep.subr.mxu0 0.0
  %1482 = vmatpush1.msra.mxu0 0.0
  %1483 = vmatprep.subr.mxu0 0.0
  %1484 = vmatpush1.msra.mxu0 0.0
  %1485 = vmatprep.subr.mxu0 0.0
  %1486 = vmatpush1.msra.mxu0 0.0
  %1487 = vmatprep.subr.mxu0 0.0
  %1488 = vmatpush1.msra.mxu0 0.0
  %1489 = vmatprep.subr.mxu0 0.0
  %1490 = vmatpush1.msra.mxu0 0.0
  %1491 = vmatprep.subr.mxu0 0.0
  %1492 = vmatpush1.msra.mxu0 0.0
  %1493 = vmatprep.subr.mxu0 0.0
  %1494 = vmatpush1.msra.mxu0 0.0
  %1495 = vmatprep.subr.mxu0 0.0
  %1496 = vmatpush1.msra.mxu0 0.0
  %1497 = vmatprep.subr.mxu0 0.0
  %1498 = vmatpush1.msra.mxu0 0.0
  %1499 = vmatprep.subr.mxu0 0.0
  %1500 = vmatpush1.msra.mxu0 0.0
  %1501 = vmatprep.subr.mxu0 0.0
  %1502 = vmatpush1.msra.mxu0 0.0
  %1503 = vmatprep.subr.mxu0 0.0
  %1504 = vmatpush1.msra.mxu0 0.0
  %1505 = vmatprep.subr.mxu0 0.0
  %1506 = vmatpush1.msra.mxu0 0.0
  %1507 = vmatprep.subr.mxu0 0.0
  %1508 = vmatpush1.msra.mxu0 0.0
  %1509 = vmatprep.subr.mxu0 0.0
  %1510 = vmatpush1.msra.mxu0 0.0
  %1511 = vmatprep.subr.mxu0 0.0
  %1512 = vmatpush1.msra.mxu0 0.0
  %1513 = vmatprep.subr.mxu0 0.0
  %1514 = vmatpush1.msra.mxu0 0.0
  %1515 = vmatprep.subr.mxu0 0.0
  %1516 = vmatpush1.msra.mxu0 0.0
  %1517 = vmatprep.subr.mxu0 0.0
  %1518 = vmatpush1.msra.mxu0 0.0
  %1519 = vmatprep.subr.mxu0 0.0
  %1520 = vmatpush1.msra.mxu0 0.0
  %1521 = vmatprep.mubr.f32.mxu0 0.0
  %1522 = vmatmul.mubr.f32.gmra.mrb[0].mxu0 %v1455
  %v1523 = vpop.f32.mrb[0].mxu0
  %v1524 = vadd.f32 %v1269, %v1523
  %v1525 = vpop.f32.mrb[0].mxu0
  %1526 = vdwg.mxu0
  %1528 = vrot.lane.b32.xlu0 %v1524, 1
  %v1529 = vpop.permute.xlu0 %1528
  %vm1531 = vcmask 15368
  %1532 = vst.msk [vmem:[%s14] sm:$0xff] %vm1531, %v1529
  %1533 = vset.pattern.permute.xlu0 0
  %1534 = vperm.xlu0 %1533, %v1524
  %v1535 = vpop.permute.xlu0 %1534
  %v1537 = vmul.f32 %v1535, %v1151
  %v1538 = vadd.f32 %v1138, %v1537
  %1539 = vmatprep.subr.mxu0 0.0
  %1540 = vmatpush1.msra.mxu0 %v1028
  %1541 = vmatprep.subr.mxu0 0.0
  %1542 = vmatpush1.msra.mxu0 %v1029
  %1543 = vmatprep.subr.mxu0 0.0
  %1544 = vmatpush1.msra.mxu0 %v1030
  %1545 = vmatprep.subr.mxu0 0.0
  %1546 = vmatpush1.msra.mxu0 %v1031
  %1547 = vmatprep.subr.mxu0 0.0
  %1548 = vmatpush1.msra.mxu0 0.0
  %1549 = vmatprep.subr.mxu0 0.0
  %1550 = vmatpush1.msra.mxu0 0.0
  %1551 = vmatprep.subr.mxu0 0.0
  %1552 = vmatpush1.msra.mxu0 0.0
  %1553 = vmatprep.subr.mxu0 0.0
  %1554 = vmatpush1.msra.mxu0 0.0
  %1555 = vmatprep.subr.mxu0 0.0
  %1556 = vmatpush1.msra.mxu0 0.0
  %1557 = vmatprep.subr.mxu0 0.0
  %1558 = vmatpush1.msra.mxu0 0.0
  %1559 = vmatprep.subr.mxu0 0.0
  %1560 = vmatpush1.msra.mxu0 0.0
  %1561 = vmatprep.subr.mxu0 0.0
  %1562 = vmatpush1.msra.mxu0 0.0
  %1563 = vmatprep.subr.mxu0 0.0
  %1564 = vmatpush1.msra.mxu0 0.0
  %1565 = vmatprep.subr.mxu0 0.0
  %1566 = vmatpush1.msra.mxu0 0.0
  %1567 = vmatprep.subr.mxu0 0.0
  %1568 = vmatpush1.msra.mxu0 0.0
  %1569 = vmatprep.subr.mxu0 0.0
  %1570 = vmatpush1.msra.mxu0 0.0
  %1571 = vmatprep.subr.mxu0 0.0
  %1572 = vmatpush1.msra.mxu0 0.0
  %1573 = vmatprep.subr.mxu0 0.0
  %1574 = vmatpush1.msra.mxu0 0.0
  %1575 = vmatprep.subr.mxu0 0.0
  %1576 = vmatpush1.msra.mxu0 0.0
  %1577 = vmatprep.subr.mxu0 0.0
  %1578 = vmatpush1.msra.mxu0 0.0
  %1579 = vmatprep.subr.mxu0 0.0
  %1580 = vmatpush1.msra.mxu0 0.0
  %1581 = vmatprep.subr.mxu0 0.0
  %1582 = vmatpush1.msra.mxu0 0.0
  %1583 = vmatprep.subr.mxu0 0.0
  %1584 = vmatpush1.msra.mxu0 0.0
  %1585 = vmatprep.subr.mxu0 0.0
  %1586 = vmatpush1.msra.mxu0 0.0
  %1587 = vmatprep.subr.mxu0 0.0
  %1588 = vmatpush1.msra.mxu0 0.0
  %1589 = vmatprep.subr.mxu0 0.0
  %1590 = vmatpush1.msra.mxu0 0.0
  %1591 = vmatprep.subr.mxu0 0.0
  %1592 = vmatpush1.msra.mxu0 0.0
  %1593 = vmatprep.subr.mxu0 0.0
  %1594 = vmatpush1.msra.mxu0 0.0
  %1595 = vmatprep.subr.mxu0 0.0
  %1596 = vmatpush1.msra.mxu0 0.0
  %1597 = vmatprep.subr.mxu0 0.0
  %1598 = vmatpush1.msra.mxu0 0.0
  %1599 = vmatprep.subr.mxu0 0.0
  %1600 = vmatpush1.msra.mxu0 0.0
  %1601 = vmatprep.subr.mxu0 0.0
  %1602 = vmatpush1.msra.mxu0 0.0
  %1603 = vmatprep.mubr.f32.mxu0 0.0
  %1604 = vmatmul.mubr.f32.gmra.mrb[0].mxu0 %v1455
  %v1605 = vpop.f32.mrb[0].mxu0
  %v1606 = vadd.f32 0.0, %v1605
  %v1607 = vpop.f32.mrb[0].mxu0
  %1608 = vdwg.mxu0
  %v1609 = vadd.f32 %v1538, %v1606
  %v1610 = vxor.u32 %v1609, 2147483648
  %v1611 = vmul.f32 %v1610, 1.442695
  %v1612 = vpow.pop %v1611
  %v1613 = vadd.f32 %v1612, 1.0
  %v1614 = vrcp.pop %v1613
  %v1615 = vmul.f32 1.0, %v1614
  %v1616 = vadd.f32 %v1606, %v1243
  %1618 = vrot.lane.b32.xlu0 %v1616, 64
  %v1619 = vpop.permute.xlu0 %1618
  %v1621 = vmul.f32 %v1615, %v1619
  %1623 = vrot.lane.b32.xlu0 %v1621, 64
  %v1624 = vpop.permute.xlu0 %1623
  %v1626 = vadd.f32 %v1538, %v1624
  %v1627 = vtanh.pop %v1626
  %v1628 = vsub.f32 1.0, %v1615
  %1630 = vrot.lane.b32.xlu0 %v1627, 96
  %v1631 = vpop.permute.xlu0 %1630
  %v1633 = vmul.f32 %v1628, %v1631
  %v1634 = vmul.f32 %v1615, %v1451
  %v1635 = vadd.f32 %v1633, %v1634
  %1637 = vrot.lane.b32.xlu0 %v1635, 96
  %v1638 = vpop.permute.xlu0 %1637
  %v1639 = vsel %vm204, %v1638, 0
  %1641 = vmatprep.subr.mxu0 0.0
  %1642 = vmatpush1.msra.mxu0 %v1033
  %1643 = vmatprep.subr.mxu0 0.0
  %1644 = vmatpush1.msra.mxu0 %v1034
  %1645 = vmatprep.subr.mxu0 0.0
  %1646 = vmatpush1.msra.mxu0 %v1035
  %1647 = vmatprep.subr.mxu0 0.0
  %1648 = vmatpush1.msra.mxu0 %v1036
  %1649 = vmatprep.subr.mxu0 0.0
  %1650 = vmatpush1.msra.mxu0 0.0
  %1651 = vmatprep.subr.mxu0 0.0
  %1652 = vmatpush1.msra.mxu0 0.0
  %1653 = vmatprep.subr.mxu0 0.0
  %1654 = vmatpush1.msra.mxu0 0.0
  %1655 = vmatprep.subr.mxu0 0.0
  %1656 = vmatpush1.msra.mxu0 0.0
  %1657 = vmatprep.subr.mxu0 0.0
  %1658 = vmatpush1.msra.mxu0 0.0
  %1659 = vmatprep.subr.mxu0 0.0
  %1660 = vmatpush1.msra.mxu0 0.0
  %1661 = vmatprep.subr.mxu0 0.0
  %1662 = vmatpush1.msra.mxu0 0.0
  %1663 = vmatprep.subr.mxu0 0.0
  %1664 = vmatpush1.msra.mxu0 0.0
  %1665 = vmatprep.subr.mxu0 0.0
  %1666 = vmatpush1.msra.mxu0 0.0
  %1667 = vmatprep.subr.mxu0 0.0
  %1668 = vmatpush1.msra.mxu0 0.0
  %1669 = vmatprep.subr.mxu0 0.0
  %1670 = vmatpush1.msra.mxu0 0.0
  %1671 = vmatprep.subr.mxu0 0.0
  %1672 = vmatpush1.msra.mxu0 0.0
  %1673 = vmatprep.subr.mxu0 0.0
  %1674 = vmatpush1.msra.mxu0 0.0
  %1675 = vmatprep.subr.mxu0 0.0
  %1676 = vmatpush1.msra.mxu0 0.0
  %1677 = vmatprep.subr.mxu0 0.0
  %1678 = vmatpush1.msra.mxu0 0.0
  %1679 = vmatprep.subr.mxu0 0.0
  %1680 = vmatpush1.msra.mxu0 0.0
  %1681 = vmatprep.subr.mxu0 0.0
  %1682 = vmatpush1.msra.mxu0 0.0
  %1683 = vmatprep.subr.mxu0 0.0
  %1684 = vmatpush1.msra.mxu0 0.0
  %1685 = vmatprep.subr.mxu0 0.0
  %1686 = vmatpush1.msra.mxu0 0.0
  %1687 = vmatprep.subr.mxu0 0.0
  %1688 = vmatpush1.msra.mxu0 0.0
  %1689 = vmatprep.subr.mxu0 0.0
  %1690 = vmatpush1.msra.mxu0 0.0
  %1691 = vmatprep.subr.mxu0 0.0
  %1692 = vmatpush1.msra.mxu0 0.0
  %1693 = vmatprep.subr.mxu0 0.0
  %1694 = vmatpush1.msra.mxu0 0.0
  %1695 = vmatprep.subr.mxu0 0.0
  %1696 = vmatpush1.msra.mxu0 0.0
  %1697 = vmatprep.subr.mxu0 0.0
  %1698 = vmatpush1.msra.mxu0 0.0
  %1699 = vmatprep.subr.mxu0 0.0
  %1700 = vmatpush1.msra.mxu0 0.0
  %1701 = vmatprep.subr.mxu0 0.0
  %1702 = vmatpush1.msra.mxu0 0.0
  %1703 = vmatprep.subr.mxu0 0.0
  %1704 = vmatpush1.msra.mxu0 0.0
  %1705 = vmatprep.mubr.f32.mxu0 0.0
  %1706 = vmatmul.mubr.f32.gmra.mrb[0].mxu0 %v1639
  %v1707 = vpop.f32.mrb[0].mxu0
  %v1708 = vadd.f32 %v1269, %v1707
  %v1709 = vpop.f32.mrb[0].mxu0
  %1710 = vdwg.mxu0
  %1712 = vrot.lane.b32.xlu0 %v1708, 2
  %v1713 = vpop.permute.xlu0 %1712
  %vm1715 = vcmask 23568
  %1716 = vst.msk [vmem:[%s14] sm:$0xff] %vm1715, %v1713
  // Predicated region
  $region58: #{tpu_custom_call.1} parent=0 // pred_check
    _
  $region59: #{tpu_custom_call.1} parent=0 // pred_check_branch
    %1718 = sbr.rel (0) target = $region61
  $region60: #{tpu_custom_call.1} parent=0 // pred_region
    _
  $region61: #{tpu_custom_call.1} parent=0 // pred_fallthru
    _
  // Predicated region
  $region62: #{tpu_custom_call.1} parent=0 // pred_check
    _
  $region63: #{tpu_custom_call.1} parent=0 // pred_check_branch
    %1720 = sbr.rel (0) target = $region65
  $region64: #{tpu_custom_call.1} parent=0 // pred_region
    _
  $region65: #{tpu_custom_call.1} parent=0 // pred_fallthru
    _

</llo_original>
